<compile_context>
chip_gen: v7x
topology: tpu7x:2x2x1
jax: 0.10.0
libtpu: 0.0.40
codegen_flags: <defaults>
</compile_context>

<pallas_src>
import functools

import jax
import jax.numpy as jnp
from jax.experimental import pallas as pl
from jax.experimental.pallas import tpu as pltpu

LANE = 128      # TPU vreg lane width
SUBLANE = 8     # TPU vreg sublane width


def _round_up(v, m):
    return ((v + m - 1) // m) * m


def _tpu_defaults():
    """Pick an MXU-native node tile and a VMEM budget per TPU generation."""
    try:
        kind = jax.devices()[0].device_kind.lower()
    except Exception:
        kind = ""
    old_mxu = any(t in kind for t in ("v2", "v3", "v4", "v5"))   # 128x128 MXU
    node_tile = 128 if old_mxu else 256                          # v6e/v7x: 2x256^2 MXU
    if "7" in kind:
        vmem_limit = 48 * 1024 * 1024      # v7x: 64 MiB physical VMEM per TC
    elif old_mxu or "v6" in kind:
        vmem_limit = 96 * 1024 * 1024      # v5e/v6e: 128 MiB physical VMEM
    else:
        vmem_limit = 48 * 1024 * 1024      # conservative default
    return node_tile, vmem_limit


def gcn_kernel(a_ref, x_ref, w1_ref, b1_ref, w2_ref, b2_ref, wl_ref, bl_ref,
               out_ref, *, n_nodes):
    """One packed group of graphs (block-diagonal adjacency) per grid step.

    a_ref  : [T, T]       block-diagonal normalized adjacency (f32 or bf16)
    x_ref  : [T, F_pad]   stacked node features, zero-padded to 128 lanes
    w*_ref : [in_pad, out_pad]  weights stored [in, out], zero-padded
    b*_ref : [1, out_pad] biases (f32), zero-padded
    out_ref: [P_rows, C_pad]  one row per packed graph (dense 128-lane store)
    """
    a = a_ref[...]

    # ---- GCNConv 1: A_hat @ (X W1) + b1, ReLU (bias/ReLU in f32) ----
    h = jnp.dot(x_ref[...], w1_ref[...], preferred_element_type=jnp.float32)
    h = jnp.dot(a, h.astype(a.dtype), preferred_element_type=jnp.float32)
    h = jnp.maximum(h + b1_ref[...], 0.0)

    # ---- GCNConv 2: A_hat @ (H W2) + b2, ReLU ----
    h = jnp.dot(h.astype(w2_ref.dtype), w2_ref[...],
                preferred_element_type=jnp.float32)
    h = jnp.dot(a, h.astype(a.dtype), preferred_element_type=jnp.float32)
    h = jnp.maximum(h + b2_ref[...], 0.0)

    # ---- per-graph mean pool as an MXU matmul (block pooling mask built
    #      in-kernel: row p averages node rows [p*N, (p+1)*N)) ----
    p_rows = out_ref.shape[0]
    node_tile = a_ref.shape[0]
    row = jax.lax.broadcasted_iota(jnp.int32, (p_rows, node_tile), 0)
    col = jax.lax.broadcasted_iota(jnp.int32, (p_rows, node_tile), 1)
    pool = jnp.where((col >= row * n_nodes) & (col < (row + 1) * n_nodes),
                     jnp.float32(1.0 / n_nodes), jnp.float32(0.0))
    pooled = jnp.dot(pool, h, preferred_element_type=jnp.float32)   # [P_rows, H_pad]

    # ---- final Linear ----
    out_ref[...] = (jnp.dot(pooled.astype(wl_ref.dtype), wl_ref[...],
                            preferred_element_type=jnp.float32)
                    + bl_ref[...])


def gcn_forward(a_hat, x, w1, b1, w2, b2, wl, bl, *,
                compute_dtype=jnp.float32, node_tile=None,
                vmem_limit_bytes=None):
    """Batched forward.  a_hat: [B, N, N], x: [B, N, F_in], weights [in, out]."""
    B, N, f_in = x.shape
    hid = w1.shape[1]
    c_out = wl.shape[1]

    dflt_tile, dflt_vmem = _tpu_defaults()
    if node_tile is None:
        node_tile = dflt_tile
    if vmem_limit_bytes is None:
        vmem_limit_bytes = dflt_vmem

    # ---- block-diagonal graph packing: PACK graphs per grid step ----
    pack = max(1, node_tile // N)
    g = (B + pack - 1) // pack          # grid steps (packed groups)
    b_pad = g * pack
    packed_n = pack * N
    n_tile = _round_up(packed_n, LANE)  # lane-dense node dimension
    p_rows = _round_up(pack, SUBLANE)   # sublane-aligned pooled rows

    f_pad = _round_up(f_in, LANE)
    h_pad = _round_up(hid, LANE)
    c_pad = _round_up(c_out, LANE)

    def pad2(m, rows, cols, dtype):
        return jnp.pad(m, ((0, rows - m.shape[0]),
                           (0, cols - m.shape[1]))).astype(dtype)

    # Pad the batch to a multiple of PACK with empty graphs (zero A & X).
    # Zero off-diagonal/padded blocks keep packed graphs independent; padded
    # node rows never reach the pool rows; padded outputs are sliced off.
    a_b = jnp.pad(a_hat, ((0, b_pad - B), (0, 0), (0, 0)))
    x_b = jnp.pad(x, ((0, b_pad - B), (0, 0), (0, 0)))

    # Block-diagonal adjacency per group.
    eye_p = jnp.eye(pack, dtype=a_hat.dtype)
    a_bd = jnp.einsum('gpij,pq->gpiqj',
                      a_b.reshape(g, pack, N, N),
                      eye_p).reshape(g, packed_n, packed_n)
    a_bd = jnp.pad(a_bd, ((0, 0),
                          (0, n_tile - packed_n),
                          (0, n_tile - packed_n))).astype(compute_dtype)

    x_p = x_b.reshape(g, packed_n, f_in)
    x_p = jnp.pad(x_p, ((0, 0),
                        (0, n_tile - packed_n),
                        (0, f_pad - f_in))).astype(compute_dtype)

    w1_p = pad2(w1, f_pad, h_pad, compute_dtype)
    w2_p = pad2(w2, h_pad, h_pad, compute_dtype)
    wl_p = pad2(wl, h_pad, c_pad, compute_dtype)
    b1_p = pad2(b1, 1, h_pad, jnp.float32)
    b2_p = pad2(b2, 1, h_pad, jnp.float32)
    bl_p = pad2(bl, 1, c_pad, jnp.float32)

    grid_spec = pltpu.PrefetchScalarGridSpec(
        num_scalar_prefetch=0,
        grid=(g,),                                               # one packed group / step
        in_specs=[
            pl.BlockSpec((None, n_tile, n_tile), lambda i: (i, 0, 0)),   # A (block-diag)
            pl.BlockSpec((None, n_tile, f_pad), lambda i: (i, 0, 0)),    # X (stacked)
            pl.BlockSpec((f_pad, h_pad), lambda i: (0, 0)),              # W1 (shared)
            pl.BlockSpec((1, h_pad), lambda i: (0, 0)),                  # b1
            pl.BlockSpec((h_pad, h_pad), lambda i: (0, 0)),              # W2
            pl.BlockSpec((1, h_pad), lambda i: (0, 0)),                  # b2
            pl.BlockSpec((h_pad, c_pad), lambda i: (0, 0)),              # Wl
            pl.BlockSpec((1, c_pad), lambda i: (0, 0)),                  # bl
        ],
        out_specs=pl.BlockSpec((None, p_rows, c_pad), lambda i: (i, 0, 0)),
    )

    out_padded = pl.pallas_call(
        functools.partial(gcn_kernel, n_nodes=N),
        out_shape=jax.ShapeDtypeStruct((g, p_rows, c_pad), jnp.float32),
        grid_spec=grid_spec,
        compiler_params=pltpu.CompilerParams(
            dimension_semantics=("parallel",),      # groups independent (megacore / 2 TCs)
            vmem_limit_bytes=vmem_limit_bytes,
        ),
    )(a_bd, x_p, w1_p, b1_p, w2_p, b2_p, wl_p, bl_p)

    out = out_padded[:, :pack, :c_out].reshape(b_pad, c_out)
    return out[:B]                                   # [B, C]


def build_normalized_adjacency(edge_index, num_nodes):
    """Dense A_hat = D^-1/2 (A + I) D^-1/2 with PyG's source->target convention."""
    src = edge_index[0]
    dst = edge_index[1]
    a = jnp.zeros((num_nodes, num_nodes), jnp.float32)
    a = a.at[dst, src].add(1.0)                       # A_hat[target, source]
    a = a + jnp.eye(num_nodes, dtype=jnp.float32)     # add self loops
    deg = jnp.sum(a, axis=1)                          # in-degree (incl. self loop)
    dis = jnp.where(deg > 0, 1.0 / jnp.sqrt(deg), 0.0)
    return dis[:, None] * a * dis[None, :]


def reference_forward(a_hat, x, w1, b1, w2, b2, wl, bl):
    def single(a, xg):
        h = jnp.maximum(a @ (xg @ w1) + b1, 0.0)
        h = jnp.maximum(a @ (h @ w2) + b2, 0.0)
        pooled = jnp.mean(h, axis=0, keepdims=True)
        return (pooled @ wl + bl)[0]
    return jax.vmap(single)(a_hat, x)


if __name__ == "__main__":
    # Shapes implied by BinaryGeometric3features: 3 input node features,
    # hidden_dim=32, binary output.  Batch of small synthetic graphs (32 so
    # packing yields >= 2 grid steps even at NODE_TILE=256).
    num_graphs, num_nodes, num_edges = 32, 16, 40
    input_dim, hidden_dim, output_dim = 3, 32, 2

    key = jax.random.PRNGKey(0)
    kx, ke, k1, k2, k3, k4 = jax.random.split(key, 6)

    x = jax.random.normal(kx, (num_graphs, num_nodes, input_dim), jnp.float32)
    edge_index = jax.random.randint(
        ke, (num_graphs, 2, num_edges), 0, num_nodes, jnp.int32)

    def glorot(k, shape):
        fan_in, fan_out = shape
        lim = jnp.sqrt(6.0 / (fan_in + fan_out))
        return jax.random.uniform(k, shape, jnp.float32, -lim, lim)

    # weights stored as [in, out] (pre-transposed from torch's [out, in])
    w1 = glorot(k1, (input_dim, hidden_dim))
    b1 = jnp.zeros((1, hidden_dim), jnp.float32)
    w2 = glorot(k2, (hidden_dim, hidden_dim))
    b2 = jnp.zeros((1, hidden_dim), jnp.float32)
    wl = glorot(k3, (hidden_dim, output_dim))
    bl = jax.random.uniform(k4, (1, output_dim), jnp.float32, -0.1, 0.1)

    a_hat = jax.vmap(lambda ei: build_normalized_adjacency(ei, num_nodes))(edge_index)

    ref = reference_forward(a_hat, x, w1, b1, w2, b2, wl, bl)

    # f32 path (default): exact-tolerance check.
    out = gcn_forward(a_hat, x, w1, b1, w2, b2, wl, bl)
    out = jax.block_until_ready(out)
    assert out.shape == (num_graphs, output_dim), out.shape
    assert jnp.allclose(out, ref, atol=2e-4), (out, ref)

    # bf16 operand path (f32 accumulation): loose-tolerance smoke check.
    out_bf16 = gcn_forward(a_hat, x, w1, b1, w2, b2, wl, bl,
                           compute_dtype=jnp.bfloat16)
    out_bf16 = jax.block_until_ready(out_bf16)
    assert jnp.all(jnp.isfinite(out_bf16))
    assert jnp.allclose(out_bf16, ref, atol=1e-1), (out_bf16, ref)

    print("KERNEL_OK")
</pallas_src>

<mosaic_0001>
module attributes {stable_mosaic.version = 11 : i64} {
  func.func @gcn_kernel(%arg0: i32, %arg1: memref<1x256x256xf32, #tpu.memory_space<vmem>>, %arg2: memref<1x256x128xf32, #tpu.memory_space<vmem>>, %arg3: memref<128x128xf32, #tpu.memory_space<vmem>>, %arg4: memref<1x128xf32, #tpu.memory_space<vmem>>, %arg5: memref<128x128xf32, #tpu.memory_space<vmem>>, %arg6: memref<1x128xf32, #tpu.memory_space<vmem>>, %arg7: memref<128x128xf32, #tpu.memory_space<vmem>>, %arg8: memref<1x128xf32, #tpu.memory_space<vmem>>, %arg9: memref<1x16x128xf32, #tpu.memory_space<vmem>>) attributes {dimension_semantics = [#tpu.dimension_semantics<parallel>], iteration_bounds = array<i64: 2>, scalar_prefetch = 0 : i64, scratch_operands = 0 : i64, tpu.core_type = #tpu.core_type<tc>, window_params = [{transform_indices = @transform_0, window_bounds = array<i64: 1, 256, 256>}, {transform_indices = @transform_1, window_bounds = array<i64: 1, 256, 128>}, {pipeline_mode = #tpu.pipeline_mode<synchronous>, transform_indices = @transform_2, window_bounds = array<i64: 128, 128>}, {pipeline_mode = #tpu.pipeline_mode<synchronous>, transform_indices = @transform_3, window_bounds = array<i64: 1, 128>}, {pipeline_mode = #tpu.pipeline_mode<synchronous>, transform_indices = @transform_4, window_bounds = array<i64: 128, 128>}, {pipeline_mode = #tpu.pipeline_mode<synchronous>, transform_indices = @transform_5, window_bounds = array<i64: 1, 128>}, {pipeline_mode = #tpu.pipeline_mode<synchronous>, transform_indices = @transform_6, window_bounds = array<i64: 128, 128>}, {pipeline_mode = #tpu.pipeline_mode<synchronous>, transform_indices = @transform_7, window_bounds = array<i64: 1, 128>}, {transform_indices = @transform_8, window_bounds = array<i64: 1, 16, 128>}]} {
    %c0 = arith.constant 0 : index
    %c0_0 = arith.constant 0 : index
    %c0_1 = arith.constant 0 : index
    %0 = vector.load %arg1[%c0, %c0_0, %c0_1] : memref<1x256x256xf32, #tpu.memory_space<vmem>>, vector<1x256x256xf32>
    %1 = vector.shape_cast %0 : vector<1x256x256xf32> to vector<256x256xf32>
    %c0_2 = arith.constant 0 : index
    %c0_3 = arith.constant 0 : index
    %c0_4 = arith.constant 0 : index
    %2 = vector.load %arg2[%c0_2, %c0_3, %c0_4] : memref<1x256x128xf32, #tpu.memory_space<vmem>>, vector<1x256x128xf32>
    %3 = vector.shape_cast %2 : vector<1x256x128xf32> to vector<256x128xf32>
    %c0_5 = arith.constant 0 : index
    %c0_6 = arith.constant 0 : index
    %4 = vector.load %arg3[%c0_5, %c0_6] : memref<128x128xf32, #tpu.memory_space<vmem>>, vector<128x128xf32>
    %cst = arith.constant dense<0.000000e+00> : vector<256x128xf32>
    %5 = tpu.matmul %3, %4, %cst {dimension_numbers = #tpu.dot_dimension_numbers<[1], [0], [0], [1], [0, 0, 1, 1], [], []>} : vector<256x128xf32>, vector<128x128xf32>, vector<256x128xf32> -> vector<256x128xf32>
    %cst_7 = arith.constant dense<0.000000e+00> : vector<256x128xf32>
    %6 = tpu.matmul %1, %5, %cst_7 {dimension_numbers = #tpu.dot_dimension_numbers<[1], [0], [0], [1], [0, 0, 1, 1], [], []>} : vector<256x256xf32>, vector<256x128xf32>, vector<256x128xf32> -> vector<256x128xf32>
    %c0_8 = arith.constant 0 : index
    %c0_9 = arith.constant 0 : index
    %7 = vector.load %arg4[%c0_8, %c0_9] : memref<1x128xf32, #tpu.memory_space<vmem>>, vector<1x128xf32>
    %8 = vector.broadcast %7 : vector<1x128xf32> to vector<256x128xf32>
    %9 = arith.addf %6, %8 : vector<256x128xf32>
    %cst_10 = arith.constant 0.000000e+00 : f32
    %10 = vector.broadcast %cst_10 : f32 to vector<256x128xf32>
    %11 = arith.maximumf %9, %10 : vector<256x128xf32>
    %c0_11 = arith.constant 0 : index
    %c0_12 = arith.constant 0 : index
    %12 = vector.load %arg5[%c0_11, %c0_12] : memref<128x128xf32, #tpu.memory_space<vmem>>, vector<128x128xf32>
    %cst_13 = arith.constant dense<0.000000e+00> : vector<256x128xf32>
    %13 = tpu.matmul %11, %12, %cst_13 {dimension_numbers = #tpu.dot_dimension_numbers<[1], [0], [0], [1], [0, 0, 1, 1], [], []>} : vector<256x128xf32>, vector<128x128xf32>, vector<256x128xf32> -> vector<256x128xf32>
    %cst_14 = arith.constant dense<0.000000e+00> : vector<256x128xf32>
    %14 = tpu.matmul %1, %13, %cst_14 {dimension_numbers = #tpu.dot_dimension_numbers<[1], [0], [0], [1], [0, 0, 1, 1], [], []>} : vector<256x256xf32>, vector<256x128xf32>, vector<256x128xf32> -> vector<256x128xf32>
    %c0_15 = arith.constant 0 : index
    %c0_16 = arith.constant 0 : index
    %15 = vector.load %arg6[%c0_15, %c0_16] : memref<1x128xf32, #tpu.memory_space<vmem>>, vector<1x128xf32>
    %16 = vector.broadcast %15 : vector<1x128xf32> to vector<256x128xf32>
    %17 = arith.addf %14, %16 : vector<256x128xf32>
    %cst_17 = arith.constant 0.000000e+00 : f32
    %18 = vector.broadcast %cst_17 : f32 to vector<256x128xf32>
    %19 = arith.maximumf %17, %18 : vector<256x128xf32>
    %20 = tpu.iota {dimensions = array<i32: 0>} : vector<16x256xi32>
    %21 = tpu.iota {dimensions = array<i32: 1>} : vector<16x256xi32>
    %c16_i32 = arith.constant 16 : i32
    %22 = vector.broadcast %c16_i32 : i32 to vector<16x256xi32>
    %23 = arith.muli %20, %22 : vector<16x256xi32>
    %24 = arith.cmpi sge, %21, %23 : vector<16x256xi32>
    %c1_i32 = arith.constant 1 : i32
    %25 = vector.broadcast %c1_i32 : i32 to vector<16x256xi32>
    %26 = arith.addi %20, %25 : vector<16x256xi32>
    %c16_i32_18 = arith.constant 16 : i32
    %27 = vector.broadcast %c16_i32_18 : i32 to vector<16x256xi32>
    %28 = arith.muli %26, %27 : vector<16x256xi32>
    %29 = arith.cmpi slt, %21, %28 : vector<16x256xi32>
    %30 = arith.andi %24, %29 : vector<16x256xi1>
    %cst_19 = arith.constant 6.250000e-02 : f32
    %cst_20 = arith.constant 0.000000e+00 : f32
    %31 = vector.broadcast %cst_19 : f32 to vector<16x256xf32>
    %32 = vector.broadcast %cst_20 : f32 to vector<16x256xf32>
    %33 = arith.select %30, %31, %32 : vector<16x256xi1>, vector<16x256xf32>
    %cst_21 = arith.constant dense<0.000000e+00> : vector<16x128xf32>
    %34 = tpu.matmul %33, %19, %cst_21 {dimension_numbers = #tpu.dot_dimension_numbers<[1], [0], [0], [1], [0, 0, 1, 1], [], []>} : vector<16x256xf32>, vector<256x128xf32>, vector<16x128xf32> -> vector<16x128xf32>
    %c0_22 = arith.constant 0 : index
    %c0_23 = arith.constant 0 : index
    %35 = vector.load %arg7[%c0_22, %c0_23] : memref<128x128xf32, #tpu.memory_space<vmem>>, vector<128x128xf32>
    %cst_24 = arith.constant dense<0.000000e+00> : vector<16x128xf32>
    %36 = tpu.matmul %34, %35, %cst_24 {dimension_numbers = #tpu.dot_dimension_numbers<[1], [0], [0], [1], [0, 0, 1, 1], [], []>} : vector<16x128xf32>, vector<128x128xf32>, vector<16x128xf32> -> vector<16x128xf32>
    %c0_25 = arith.constant 0 : index
    %c0_26 = arith.constant 0 : index
    %37 = vector.load %arg8[%c0_25, %c0_26] : memref<1x128xf32, #tpu.memory_space<vmem>>, vector<1x128xf32>
    %38 = vector.broadcast %37 : vector<1x128xf32> to vector<16x128xf32>
    %39 = arith.addf %36, %38 : vector<16x128xf32>
    %c0_27 = arith.constant 0 : index
    %c0_28 = arith.constant 0 : index
    %c0_29 = arith.constant 0 : index
    %40 = vector.load %arg9[%c0_27, %c0_28, %c0_29] : memref<1x16x128xf32, #tpu.memory_space<vmem>>, vector<1x16x128xf32>
    %41 = vector.shape_cast %40 : vector<1x16x128xf32> to vector<16x128xf32>
    %42 = vector.shape_cast %39 : vector<16x128xf32> to vector<1x16x128xf32>
    tpu.vector_store %arg9[%c0_27, %c0_28, %c0_29], %42 {strides = array<i32>} : memref<1x16x128xf32, #tpu.memory_space<vmem>>, vector<1x16x128xf32>,
    return
  }
  func.func @transform_0(%arg0: i32) -> (i32, i32, i32) {
    %c0_i32 = arith.constant 0 : i32
    %c0_i32_0 = arith.constant 0 : i32
    %c0_i32_1 = arith.constant 0 : i32
    return %arg0, %c0_i32, %c0_i32_0 : i32, i32, i32
  }
  func.func @transform_1(%arg0: i32) -> (i32, i32, i32) {
    %c0_i32 = arith.constant 0 : i32
    %c0_i32_0 = arith.constant 0 : i32
    %c0_i32_1 = arith.constant 0 : i32
    return %arg0, %c0_i32, %c0_i32_0 : i32, i32, i32
  }
  func.func @transform_2(%arg0: i32) -> (i32, i32) {
    %c0_i32 = arith.constant 0 : i32
    %c0_i32_0 = arith.constant 0 : i32
    %c0_i32_1 = arith.constant 0 : i32
    return %c0_i32, %c0_i32_0 : i32, i32
  }
  func.func @transform_3(%arg0: i32) -> (i32, i32) {
    %c0_i32 = arith.constant 0 : i32
    %c0_i32_0 = arith.constant 0 : i32
    %c0_i32_1 = arith.constant 0 : i32
    return %c0_i32, %c0_i32_0 : i32, i32
  }
  func.func @transform_4(%arg0: i32) -> (i32, i32) {
    %c0_i32 = arith.constant 0 : i32
    %c0_i32_0 = arith.constant 0 : i32
    %c0_i32_1 = arith.constant 0 : i32
    return %c0_i32, %c0_i32_0 : i32, i32
  }
  func.func @transform_5(%arg0: i32) -> (i32, i32) {
    %c0_i32 = arith.constant 0 : i32
    %c0_i32_0 = arith.constant 0 : i32
    %c0_i32_1 = arith.constant 0 : i32
    return %c0_i32, %c0_i32_0 : i32, i32
  }
  func.func @transform_6(%arg0: i32) -> (i32, i32) {
    %c0_i32 = arith.constant 0 : i32
    %c0_i32_0 = arith.constant 0 : i32
    %c0_i32_1 = arith.constant 0 : i32
    return %c0_i32, %c0_i32_0 : i32, i32
  }
  func.func @transform_7(%arg0: i32) -> (i32, i32) {
    %c0_i32 = arith.constant 0 : i32
    %c0_i32_0 = arith.constant 0 : i32
    %c0_i32_1 = arith.constant 0 : i32
    return %c0_i32, %c0_i32_0 : i32, i32
  }
  func.func @transform_8(%arg0: i32) -> (i32, i32, i32) {
    %c0_i32 = arith.constant 0 : i32
    %c0_i32_0 = arith.constant 0 : i32
    %c0_i32_1 = arith.constant 0 : i32
    return %arg0, %c0_i32, %c0_i32_0 : i32, i32, i32
  }
}

</mosaic_0001>

<llo_original>
// kernel: tpu_custom_call.1
$region0: #{tpu_custom_call.1}
  #allocation0 [shape = 'u32[]', space=smem, size = 0x4, offset = 0x4, fixed_abs, tag = 'smem constant byte address 0x4 - core index']
  #allocation1 [shape = 'u32[144,128]{1,0:T(1,128)}', space=vmem, size = 0x12000, scoped, tag = 'internal scratch']
  %s0 = inlined_call_operand.hbm [shape: f32[2,256,256], index: 0, kind: input, shape index: {}]
  %s1 = inlined_call_operand.hbm [shape: f32[2,256,128], index: 1, kind: input, shape index: {}]
  %s2 = inlined_call_operand.hbm [shape: f32[128,128], index: 2, kind: input, shape index: {}]
  %s3 = inlined_call_operand.vmem [shape: f32[1,128], index: 3, kind: input, shape index: {}]
  %s4 = inlined_call_operand.hbm [shape: f32[128,128], index: 4, kind: input, shape index: {}]
  %s5 = inlined_call_operand.vmem [shape: f32[1,128], index: 5, kind: input, shape index: {}]
  %s6 = inlined_call_operand.hbm [shape: f32[128,128], index: 6, kind: input, shape index: {}]
  %s7 = inlined_call_operand.vmem [shape: f32[1,128], index: 7, kind: input, shape index: {}]
  %s8 = inlined_call_operand.hbm [shape: f32[2,16,128], index: 8, kind: output, shape index: {}]
  %s9 = sld [smem:[#allocation0]]
  $region85: #{tpu_custom_call.1} parent=0
    _
  %s11 = ssub.s32 1, %s9
  %s12 = scalar_select 0, %s11, %s9
  $region1: #{tpu_custom_call.1} parent=0
    #allocation2 [shape = 'u8[524288]{0}', space=vmem, size = 0x80000, scoped, tag = 'input window, operand 0']
    #allocation3 [shape = 's32[2]{0}', space=sflag, size = 0x8, scoped, tag = 'scoped memory for tpu_custom_call.1']
    #allocation4 [shape = 's32[2]{0}', space=sflag, size = 0x8, scoped, tag = 'scoped memory for tpu_custom_call.1']
    #allocation5 [shape = 'u8[262144]{0}', space=vmem, size = 0x40000, scoped, tag = 'input window, operand 1']
    #allocation6 [shape = 's32[2]{0}', space=sflag, size = 0x8, scoped, tag = 'scoped memory for tpu_custom_call.1']
    #allocation7 [shape = 'u8[65536]{0}', space=vmem, size = 0x10000, scoped, tag = 'input window, operand 2, single buffered']
    #allocation8 [shape = 'u8[65536]{0}', space=vmem, size = 0x10000, scoped, tag = 'input window, operand 4, single buffered']
    #allocation9 [shape = 's32[1]{0}', space=sflag, size = 0x4, scoped, tag = 'scoped memory for tpu_custom_call.1']
    #allocation10 [shape = 'u8[65536]{0}', space=vmem, size = 0x10000, scoped, tag = 'input window, operand 6, single buffered']
    #allocation11 [shape = 'u8[16384]{0}', space=vmem, size = 0x4000, scoped, tag = 'output window, operand 0']
    %13 = vsyncpa [#allocation3], 0
    %s14 = scalar_lea.sflag [#allocation3], 1
    %15 = vsyncpa %s14, 0
    %16 = vsyncpa [#allocation6], 0
    %s17 = scalar_lea.sflag [#allocation6], 1
    %18 = vsyncpa %s17, 0
    %19 = vsyncpa [#allocation9], 0
    %20 = vsyncpa [#allocation4], 0
    %s21 = scalar_lea.sflag [#allocation4], 1
    %22 = vsyncpa %s21, 0
    loop: start=0, step=1, limit=4
    $region2: #{tpu_custom_call.1} parent=1 // loop_pre_header
      _
    $region3: #{tpu_custom_call.1} parent=1 // loop_header
      %s24 = sphi 0, %s28
      %p25 = scmp.ge.s32.totalorder %s24, 4
      %s34 = sphi 0, %s36
      %s37 = sphi 0, %s34
      %s38 = sphi 0, %s37
      %s54 = sphi 0, %s38
      %s60 = sphi 0, %s62
      %s63 = sphi 0, %s60
      %s64 = sphi 0, %s63
      %s80 = sphi 0, %s64
      %s84 = sphi 0, %s84
      %s86 = sphi 0, %s84
      %s87 = sphi 0, %s86
      %s101 = sphi 0, %s87
      %s105 = sphi 0, %s105
      %s107 = sphi 0, %s105
      %s108 = sphi 0, %s107
      %s122 = sphi 0, %s108
      %s126 = sphi 0, %s126
      %s128 = sphi 0, %s126
      %s129 = sphi 0, %s128
      %s143 = sphi 0, %s129
      %s147 = sphi 0, %s147
      %s149 = sphi 0, %s147
      %s150 = sphi 0, %s149
      %s164 = sphi 0, %s150
      %s168 = sphi 0, %s168
      %s170 = sphi 0, %s168
      %s171 = sphi 0, %s170
      %s185 = sphi 0, %s171
      %s189 = sphi 0, %s189
      %s191 = sphi 0, %s189
      %s192 = sphi 0, %s191
      %s206 = sphi 0, %s192
      %s212 = sphi 0, %s214
      %s215 = sphi 0, %s212
      %s216 = sphi 0, %s215
      %s232 = sphi 0, %s216
    $region4: #{tpu_custom_call.1} parent=1 // loop_header_branch
      %27 = sbr.rel (%p25) target = $region8
    $region5: #{tpu_custom_call.1} parent=1 // loop_body
      %s29 = ssub.s32 %s24, 1
      %s30 = ssub.s32 %s24, 2
      %s31 = sadd.s32 %s24, 1
      %s32 = ssub.s32 %s24, %s31
      %p33 = scmp.eq.s32.totalorder %s32, 0
      %s35 = sadd.s32 %s34, 1
      %s36 = scalar_select %p33, %s34, %s35
      %p39 = pneg %p33
      %p40 = scmp.eq.s32.totalorder %s24, 1
      %p41 = por %p39, %p40
      %p42 = scmp.ne.s32.totalorder %s34, %s37
      %p43 = scmp.eq.s32.totalorder %s24, 0
      %p44 = por %p42, %p43
      %p45 = scmp.ne.s32.totalorder %s34, %s37
      %p46 = scmp.eq.s32.totalorder %s29, 1
      %p47 = por %p45, %p46
      %p48 = scmp.ne.s32.totalorder %s37, %s38
      %p49 = scmp.eq.s32.totalorder %s29, 0
      %p50 = por %p48, %p49
      %p51 = scmp.ne.s32.totalorder %s37, %s38
      %p52 = scmp.eq.s32.totalorder %s30, 1
      %p53 = por %p51, %p52
      %p55 = scmp.ne.s32.totalorder %s38, %s54
      %p56 = scmp.eq.s32.totalorder %s30, 0
      %p57 = por %p55, %p56
      %s58 = ssub.s32 %s24, %s31
      %p59 = scmp.eq.s32.totalorder %s58, 0
      %s61 = sadd.s32 %s60, 1
      %s62 = scalar_select %p59, %s60, %s61
      %p65 = pneg %p59
      %p66 = scmp.eq.s32.totalorder %s24, 1
      %p67 = por %p65, %p66
      %p68 = scmp.ne.s32.totalorder %s60, %s63
      %p69 = scmp.eq.s32.totalorder %s24, 0
      %p70 = por %p68, %p69
      %p71 = scmp.ne.s32.totalorder %s60, %s63
      %p72 = scmp.eq.s32.totalorder %s29, 1
      %p73 = por %p71, %p72
      %p74 = scmp.ne.s32.totalorder %s63, %s64
      %p75 = scmp.eq.s32.totalorder %s29, 0
      %p76 = por %p74, %p75
      %p77 = scmp.ne.s32.totalorder %s63, %s64
      %p78 = scmp.eq.s32.totalorder %s30, 1
      %p79 = por %p77, %p78
      %p81 = scmp.ne.s32.totalorder %s64, %s80
      %p82 = scmp.eq.s32.totalorder %s30, 0
      %p83 = por %p81, %p82
      %s85 = sadd.s32 %s84, 1
      %p88 = scmp.eq.s32.totalorder %s24, 1
      %p89 = scmp.ne.s32.totalorder %s84, %s86
      %p90 = scmp.eq.s32.totalorder %s24, 0
      %p91 = por %p89, %p90
      %p92 = scmp.ne.s32.totalorder %s84, %s86
      %p93 = scmp.eq.s32.totalorder %s29, 1
      %p94 = por %p92, %p93
      %p95 = scmp.ne.s32.totalorder %s86, %s87
      %p96 = scmp.eq.s32.totalorder %s29, 0
      %p97 = por %p95, %p96
      %p98 = scmp.ne.s32.totalorder %s86, %s87
      %p99 = scmp.eq.s32.totalorder %s30, 1
      %p100 = por %p98, %p99
      %p102 = scmp.ne.s32.totalorder %s87, %s101
      %p103 = scmp.eq.s32.totalorder %s30, 0
      %p104 = por %p102, %p103
      %s106 = sadd.s32 %s105, 1
      %p109 = scmp.eq.s32.totalorder %s24, 1
      %p110 = scmp.ne.s32.totalorder %s105, %s107
      %p111 = scmp.eq.s32.totalorder %s24, 0
      %p112 = por %p110, %p111
      %p113 = scmp.ne.s32.totalorder %s105, %s107
      %p114 = scmp.eq.s32.totalorder %s29, 1
      %p115 = por %p113, %p114
      %p116 = scmp.ne.s32.totalorder %s107, %s108
      %p117 = scmp.eq.s32.totalorder %s29, 0
      %p118 = por %p116, %p117
      %p119 = scmp.ne.s32.totalorder %s107, %s108
      %p120 = scmp.eq.s32.totalorder %s30, 1
      %p121 = por %p119, %p120
      %p123 = scmp.ne.s32.totalorder %s108, %s122
      %p124 = scmp.eq.s32.totalorder %s30, 0
      %p125 = por %p123, %p124
      %s127 = sadd.s32 %s126, 1
      %p130 = scmp.eq.s32.totalorder %s24, 1
      %p131 = scmp.ne.s32.totalorder %s126, %s128
      %p132 = scmp.eq.s32.totalorder %s24, 0
      %p133 = por %p131, %p132
      %p134 = scmp.ne.s32.totalorder %s126, %s128
      %p135 = scmp.eq.s32.totalorder %s29, 1
      %p136 = por %p134, %p135
      %p137 = scmp.ne.s32.totalorder %s128, %s129
      %p138 = scmp.eq.s32.totalorder %s29, 0
      %p139 = por %p137, %p138
      %p140 = scmp.ne.s32.totalorder %s128, %s129
      %p141 = scmp.eq.s32.totalorder %s30, 1
      %p142 = por %p140, %p141
      %p144 = scmp.ne.s32.totalorder %s129, %s143
      %p145 = scmp.eq.s32.totalorder %s30, 0
      %p146 = por %p144, %p145
      %s148 = sadd.s32 %s147, 1
      %p151 = scmp.eq.s32.totalorder %s24, 1
      %p152 = scmp.ne.s32.totalorder %s147, %s149
      %p153 = scmp.eq.s32.totalorder %s24, 0
      %p154 = por %p152, %p153
      %p155 = scmp.ne.s32.totalorder %s147, %s149
      %p156 = scmp.eq.s32.totalorder %s29, 1
      %p157 = por %p155, %p156
      %p158 = scmp.ne.s32.totalorder %s149, %s150
      %p159 = scmp.eq.s32.totalorder %s29, 0
      %p160 = por %p158, %p159
      %p161 = scmp.ne.s32.totalorder %s149, %s150
      %p162 = scmp.eq.s32.totalorder %s30, 1
      %p163 = por %p161, %p162
      %p165 = scmp.ne.s32.totalorder %s150, %s164
      %p166 = scmp.eq.s32.totalorder %s30, 0
      %p167 = por %p165, %p166
      %s169 = sadd.s32 %s168, 1
      %p172 = scmp.eq.s32.totalorder %s24, 1
      %p173 = scmp.ne.s32.totalorder %s168, %s170
      %p174 = scmp.eq.s32.totalorder %s24, 0
      %p175 = por %p173, %p174
      %p176 = scmp.ne.s32.totalorder %s168, %s170
      %p177 = scmp.eq.s32.totalorder %s29, 1
      %p178 = por %p176, %p177
      %p179 = scmp.ne.s32.totalorder %s170, %s171
      %p180 = scmp.eq.s32.totalorder %s29, 0
      %p181 = por %p179, %p180
      %p182 = scmp.ne.s32.totalorder %s170, %s171
      %p183 = scmp.eq.s32.totalorder %s30, 1
      %p184 = por %p182, %p183
      %p186 = scmp.ne.s32.totalorder %s171, %s185
      %p187 = scmp.eq.s32.totalorder %s30, 0
      %p188 = por %p186, %p187
      %s190 = sadd.s32 %s189, 1
      %p193 = scmp.eq.s32.totalorder %s24, 1
      %p194 = scmp.ne.s32.totalorder %s189, %s191
      %p195 = scmp.eq.s32.totalorder %s24, 0
      %p196 = por %p194, %p195
      %p197 = scmp.ne.s32.totalorder %s189, %s191
      %p198 = scmp.eq.s32.totalorder %s29, 1
      %p199 = por %p197, %p198
      %p200 = scmp.ne.s32.totalorder %s191, %s192
      %p201 = scmp.eq.s32.totalorder %s29, 0
      %p202 = por %p200, %p201
      %p203 = scmp.ne.s32.totalorder %s191, %s192
      %p204 = scmp.eq.s32.totalorder %s30, 1
      %p205 = por %p203, %p204
      %p207 = scmp.ne.s32.totalorder %s192, %s206
      %p208 = scmp.eq.s32.totalorder %s30, 0
      %p209 = por %p207, %p208
      %s210 = ssub.s32 %s24, %s31
      %p211 = scmp.eq.s32.totalorder %s210, 0
      %s213 = sadd.s32 %s212, 1
      %s214 = scalar_select %p211, %s212, %s213
      %p217 = pneg %p211
      %p218 = scmp.eq.s32.totalorder %s24, 1
      %p219 = por %p217, %p218
      %p220 = scmp.ne.s32.totalorder %s212, %s215
      %p221 = scmp.eq.s32.totalorder %s24, 0
      %p222 = por %p220, %p221
      %p223 = scmp.ne.s32.totalorder %s212, %s215
      %p224 = scmp.eq.s32.totalorder %s29, 1
      %p225 = por %p223, %p224
      %p226 = scmp.ne.s32.totalorder %s215, %s216
      %p227 = scmp.eq.s32.totalorder %s29, 0
      %p228 = por %p226, %p227
      %p229 = scmp.ne.s32.totalorder %s215, %s216
      %p230 = scmp.eq.s32.totalorder %s30, 1
      %p231 = por %p229, %p230
      %p233 = scmp.ne.s32.totalorder %s216, %s232
      %p234 = scmp.eq.s32.totalorder %s30, 0
      %p235 = por %p233, %p234
      %p236 = scmp.le.s32.totalorder 1, %s24
      %p237 = scmp.lt.s32.totalorder %s24, 3
      %p238 = pnand %p236, %p237
      %p239 = pneg %p238
      // Predicated region
      $region9: #{tpu_custom_call.1} parent=5 // pred_check
        _
      $region10: #{tpu_custom_call.1} parent=5 // pred_check_branch
        %241 = sbr.rel (%p238) target = $region12
      $region11: #{tpu_custom_call.1} parent=5 // pred_region
        %s242 = ssub.s32 %s24, 1
        // Predicated region
        $region13: #{tpu_custom_call.1} parent=11 // pred_check
          %p243 = pneg %p97
        $region14: #{tpu_custom_call.1} parent=11 // pred_check_branch
          %245 = sbr.rel (%p243) target = $region16
        $region15: #{tpu_custom_call.1} parent=11 // pred_region
          %s247 = ssub.s32 2048, 2048
          %248 = vsyncadd [#allocation6], %s247
          %s249 = sshll.u32 [#allocation7], 4
          %s250 = int_to_ptr.vmem [resolvable:$true] %s249
          %255 = dma.hbm_to_vmem [thread:$0]  %s2, 2048, %s250, [#allocation6], 128, 128, 8
        $region16: #{tpu_custom_call.1} parent=11 // pred_fallthru
          _
        // Predicated region
        $region17: #{tpu_custom_call.1} parent=11 // pred_check
          %p256 = pneg %p118
        $region18: #{tpu_custom_call.1} parent=11 // pred_check_branch
          %258 = sbr.rel (%p256) target = $region20
        $region19: #{tpu_custom_call.1} parent=11 // pred_region
          _
        $region20: #{tpu_custom_call.1} parent=11 // pred_fallthru
          _
        // Predicated region
        $region21: #{tpu_custom_call.1} parent=11 // pred_check
          %p259 = pneg %p139
        $region22: #{tpu_custom_call.1} parent=11 // pred_check_branch
          %261 = sbr.rel (%p259) target = $region24
        $region23: #{tpu_custom_call.1} parent=11 // pred_region
          %s263 = ssub.s32 2048, 2048
          %264 = vsyncadd [#allocation9], %s263
          %s265 = sshll.u32 [#allocation8], 4
          %s266 = int_to_ptr.vmem [resolvable:$true] %s265
          %271 = dma.hbm_to_vmem [thread:$0]  %s4, 2048, %s266, [#allocation9], 128, 128, 8
        $region24: #{tpu_custom_call.1} parent=11 // pred_fallthru
          _
        // Predicated region
        $region25: #{tpu_custom_call.1} parent=11 // pred_check
          %p272 = pneg %p160
        $region26: #{tpu_custom_call.1} parent=11 // pred_check_branch
          %274 = sbr.rel (%p272) target = $region28
        $region27: #{tpu_custom_call.1} parent=11 // pred_region
          _
        $region28: #{tpu_custom_call.1} parent=11 // pred_fallthru
          _
        // Predicated region
        $region29: #{tpu_custom_call.1} parent=11 // pred_check
          %p275 = pneg %p181
        $region30: #{tpu_custom_call.1} parent=11 // pred_check_branch
          %277 = sbr.rel (%p275) target = $region32
        $region31: #{tpu_custom_call.1} parent=11 // pred_region
          %s279 = ssub.s32 2048, 2048
          %280 = vsyncadd [#allocation9], %s279
          %s281 = sshll.u32 [#allocation10], 4
          %s282 = int_to_ptr.vmem [resolvable:$true] %s281
          %287 = dma.hbm_to_vmem [thread:$0]  %s6, 2048, %s282, [#allocation9], 128, 128, 8
        $region32: #{tpu_custom_call.1} parent=11 // pred_fallthru
          _
        // Predicated region
        $region33: #{tpu_custom_call.1} parent=11 // pred_check
          %p288 = pneg %p202
        $region34: #{tpu_custom_call.1} parent=11 // pred_check_branch
          %290 = sbr.rel (%p288) target = $region36
        $region35: #{tpu_custom_call.1} parent=11 // pred_region
          _
        $region36: #{tpu_custom_call.1} parent=11 // pred_fallthru
          _
      $region12: #{tpu_custom_call.1} parent=5 // pred_fallthru
        _
      %p291 = scmp.lt.s32.totalorder %s24, 2
      // Predicated region
      $region37: #{tpu_custom_call.1} parent=5 // pred_check
        %p292 = pneg %p291
      $region38: #{tpu_custom_call.1} parent=5 // pred_check_branch
        %294 = sbr.rel (%p292) target = $region40
      $region39: #{tpu_custom_call.1} parent=5 // pred_region
        // Predicated region
        $region41: #{tpu_custom_call.1} parent=39 // pred_check
          %p295 = pneg %p44
        $region42: #{tpu_custom_call.1} parent=39 // pred_check_branch
          %297 = sbr.rel (%p295) target = $region44
        $region43: #{tpu_custom_call.1} parent=39 // pred_region
          %s298 = sand.u32 %s34, 1
          %s299 = scalar_lea.sflag [#allocation3], %s298
          %s300 = sand.u32 %s34, 1
          %s301 = smul.addr %s300, 512
          %s302 = scalar_lea.vmem [#allocation2], %s301
          %s304 = ssub.s32 8192, 8192
          %305 = vsyncadd %s299, %s304
          %s306 = smul.addr %s24, 64
          %s307 = smul.addr %s306, 128
          %s308 = scalar_lea.hbm %s0, %s307
          %s309 = sshll.u32 %s302, 4
          %s310 = int_to_ptr.vmem [resolvable:$true] %s309
          %315 = dma.hbm_to_vmem [thread:$0]  %s308, 8192, %s310, %s299, 256, 256, 16
        $region44: #{tpu_custom_call.1} parent=39 // pred_fallthru
          _
        // Predicated region
        $region45: #{tpu_custom_call.1} parent=39 // pred_check
          %p316 = pneg %p70
        $region46: #{tpu_custom_call.1} parent=39 // pred_check_branch
          %318 = sbr.rel (%p316) target = $region48
        $region47: #{tpu_custom_call.1} parent=39 // pred_region
          %s319 = sand.u32 %s24, 1
          %s320 = scalar_lea.sflag [#allocation6], %s319
          %s321 = sand.u32 %s60, 1
          %s322 = smul.addr %s321, 256
          %s323 = scalar_lea.vmem [#allocation5], %s322
          %s325 = ssub.s32 4096, 4096
          %326 = vsyncadd %s320, %s325
          %s327 = smul.addr %s24, 32
          %s328 = smul.addr %s327, 128
          %s329 = scalar_lea.hbm %s1, %s328
          %s330 = sshll.u32 %s323, 4
          %s331 = int_to_ptr.vmem [resolvable:$true] %s330
          %336 = dma.hbm_to_vmem [thread:$0]  %s329, 4096, %s331, %s320, 128, 128, 8
        $region48: #{tpu_custom_call.1} parent=39 // pred_fallthru
          _
      $region40: #{tpu_custom_call.1} parent=5 // pred_fallthru
        _
      %p337 = scmp.le.s32.totalorder 1, %s24
      %p338 = scmp.lt.s32.totalorder %s24, 3
      %p339 = pnand %p337, %p338
      %p340 = pneg %p339
      // Predicated region
      $region49: #{tpu_custom_call.1} parent=5 // pred_check
        _
      $region50: #{tpu_custom_call.1} parent=5 // pred_check_branch
        %342 = sbr.rel (%p339) target = $region52
      $region51: #{tpu_custom_call.1} parent=5 // pred_region
        %s343 = ssub.s32 %s24, 1
        %s344 = sand.u32 %s37, 1
        %s345 = scalar_lea.sflag [#allocation3], %s344
        %s346 = sand.u32 %s37, 1
        %s347 = smul.addr %s346, 512
        %s348 = scalar_lea.vmem [#allocation2], %s347
        // Predicated region
        $region53: #{tpu_custom_call.1} parent=51 // pred_check
          %p349 = pneg %p50
        $region54: #{tpu_custom_call.1} parent=51 // pred_check_branch
          %351 = sbr.rel (%p349) target = $region56
        $region55: #{tpu_custom_call.1} parent=51 // pred_region
          %352 = dma.done %s345, 8192
        $region56: #{tpu_custom_call.1} parent=51 // pred_fallthru
          _
        %s353 = sand.u32 %s29, 1
        %s354 = scalar_lea.sflag [#allocation6], %s353
        %s355 = sand.u32 %s63, 1
        %s356 = smul.addr %s355, 256
        %s357 = scalar_lea.vmem [#allocation5], %s356
        // Predicated region
        $region57: #{tpu_custom_call.1} parent=51 // pred_check
          %p358 = pneg %p76
        $region58: #{tpu_custom_call.1} parent=51 // pred_check_branch
          %360 = sbr.rel (%p358) target = $region60
        $region59: #{tpu_custom_call.1} parent=51 // pred_region
          %361 = dma.done %s354, 4096
        $region60: #{tpu_custom_call.1} parent=51 // pred_fallthru
          _
        // Predicated region
        $region61: #{tpu_custom_call.1} parent=51 // pred_check
          %p362 = pneg %p97
        $region62: #{tpu_custom_call.1} parent=51 // pred_check_branch
          %364 = sbr.rel (%p362) target = $region64
        $region63: #{tpu_custom_call.1} parent=51 // pred_region
          %365 = dma.done [#allocation6], 2048
        $region64: #{tpu_custom_call.1} parent=51 // pred_fallthru
          _
        // Predicated region
        $region65: #{tpu_custom_call.1} parent=51 // pred_check
          %p366 = pneg %p139
        $region66: #{tpu_custom_call.1} parent=51 // pred_check_branch
          %368 = sbr.rel (%p366) target = $region68
        $region67: #{tpu_custom_call.1} parent=51 // pred_region
          %369 = dma.done [#allocation9], 2048
        $region68: #{tpu_custom_call.1} parent=51 // pred_fallthru
          _
        // Predicated region
        $region69: #{tpu_custom_call.1} parent=51 // pred_check
          %p370 = pneg %p181
        $region70: #{tpu_custom_call.1} parent=51 // pred_check_branch
          %372 = sbr.rel (%p370) target = $region72
        $region71: #{tpu_custom_call.1} parent=51 // pred_region
          %373 = dma.done [#allocation9], 2048
        $region72: #{tpu_custom_call.1} parent=51 // pred_fallthru
          _
        %s374 = sand.u32 %s37, 1
        %s375 = scalar_lea.sflag [#allocation3], %s374
        %s376 = sand.u32 %s37, 1
        %s377 = smul.addr %s376, 512
        %s378 = scalar_lea.vmem [#allocation2], %s377
        %p379 = pneg %p50
        %p380 = pneg %p47
        %s381 = sand.u32 %s29, 1
        %s382 = scalar_lea.sflag [#allocation6], %s381
        %s383 = sand.u32 %s63, 1
        %s384 = smul.addr %s383, 256
        %s385 = scalar_lea.vmem [#allocation5], %s384
        %p386 = pneg %p76
        %p387 = pneg %p73
        %p388 = pneg %p97
        %p389 = pneg %p94
        %p390 = pneg %p118
        %p391 = pneg %p115
        %p392 = pneg %p139
        %p393 = pneg %p136
        %p394 = pneg %p160
        %p395 = pneg %p157
        %p396 = pneg %p181
        %p397 = pneg %p178
        %p398 = pneg %p202
        %p399 = pneg %p199
        %p400 = pneg %p228
        %p401 = pneg %p225
        %s402 = sand.u32 %s215, 1
        %s403 = scalar_lea.sflag [#allocation4], %s402
        %s404 = sand.u32 %s215, 1
        %s405 = smul.addr %s404, 16
        %s406 = scalar_lea.vmem [#allocation11], %s405
        %v407 = vld [vmem:[%s348] sm:$0xff]
        %v408 = vld [vmem:[%s348 + $0x8] sm:$0xff]
        %v409 = vld [vmem:[%s348 + $0x10] sm:$0xff]
        %v410 = vld [vmem:[%s348 + $0x18] sm:$0xff]
        %v411 = vld [vmem:[%s348 + $0x20] sm:$0xff]
        %v412 = vld [vmem:[%s348 + $0x28] sm:$0xff]
        %v413 = vld [vmem:[%s348 + $0x30] sm:$0xff]
        %v414 = vld [vmem:[%s348 + $0x38] sm:$0xff]
        %v415 = vld [vmem:[%s348 + $0x40] sm:$0xff]
        %v416 = vld [vmem:[%s348 + $0x48] sm:$0xff]
        %v417 = vld [vmem:[%s348 + $0x50] sm:$0xff]
        %v418 = vld [vmem:[%s348 + $0x58] sm:$0xff]
        %v419 = vld [vmem:[%s348 + $0x60] sm:$0xff]
        %v420 = vld [vmem:[%s348 + $0x68] sm:$0xff]
        %v421 = vld [vmem:[%s348 + $0x70] sm:$0xff]
        %v422 = vld [vmem:[%s348 + $0x78] sm:$0xff]
        %v423 = vld [vmem:[%s348 + $0x80] sm:$0xff]
        %v424 = vld [vmem:[%s348 + $0x88] sm:$0xff]
        %v425 = vld [vmem:[%s348 + $0x90] sm:$0xff]
        %v426 = vld [vmem:[%s348 + $0x98] sm:$0xff]
        %v427 = vld [vmem:[%s348 + $0xa0] sm:$0xff]
        %v428 = vld [vmem:[%s348 + $0xa8] sm:$0xff]
        %v429 = vld [vmem:[%s348 + $0xb0] sm:$0xff]
        %v430 = vld [vmem:[%s348 + $0xb8] sm:$0xff]
        %v431 = vld [vmem:[%s348 + $0xc0] sm:$0xff]
        %v432 = vld [vmem:[%s348 + $0xc8] sm:$0xff]
        %v433 = vld [vmem:[%s348 + $0xd0] sm:$0xff]
        %v434 = vld [vmem:[%s348 + $0xd8] sm:$0xff]
        %v435 = vld [vmem:[%s348 + $0xe0] sm:$0xff]
        %v436 = vld [vmem:[%s348 + $0xe8] sm:$0xff]
        %v437 = vld [vmem:[%s348 + $0xf0] sm:$0xff]
        %v438 = vld [vmem:[%s348 + $0xf8] sm:$0xff]
        %v439 = vld [vmem:[%s348 + $0x100] sm:$0xff]
        %v440 = vld [vmem:[%s348 + $0x108] sm:$0xff]
        %v441 = vld [vmem:[%s348 + $0x110] sm:$0xff]
        %v442 = vld [vmem:[%s348 + $0x118] sm:$0xff]
        %v443 = vld [vmem:[%s348 + $0x120] sm:$0xff]
        %v444 = vld [vmem:[%s348 + $0x128] sm:$0xff]
        %v445 = vld [vmem:[%s348 + $0x130] sm:$0xff]
        %v446 = vld [vmem:[%s348 + $0x138] sm:$0xff]
        %v447 = vld [vmem:[%s348 + $0x140] sm:$0xff]
        %v448 = vld [vmem:[%s348 + $0x148] sm:$0xff]
        %v449 = vld [vmem:[%s348 + $0x150] sm:$0xff]
        %v450 = vld [vmem:[%s348 + $0x158] sm:$0xff]
        %v451 = vld [vmem:[%s348 + $0x160] sm:$0xff]
        %v452 = vld [vmem:[%s348 + $0x168] sm:$0xff]
        %v453 = vld [vmem:[%s348 + $0x170] sm:$0xff]
        %v454 = vld [vmem:[%s348 + $0x178] sm:$0xff]
        %v455 = vld [vmem:[%s348 + $0x180] sm:$0xff]
        %v456 = vld [vmem:[%s348 + $0x188] sm:$0xff]
        %v457 = vld [vmem:[%s348 + $0x190] sm:$0xff]
        %v458 = vld [vmem:[%s348 + $0x198] sm:$0xff]
        %v459 = vld [vmem:[%s348 + $0x1a0] sm:$0xff]
        %v460 = vld [vmem:[%s348 + $0x1a8] sm:$0xff]
        %v461 = vld [vmem:[%s348 + $0x1b0] sm:$0xff]
        %v462 = vld [vmem:[%s348 + $0x1b8] sm:$0xff]
        %v463 = vld [vmem:[%s348 + $0x1c0] sm:$0xff]
        %v464 = vld [vmem:[%s348 + $0x1c8] sm:$0xff]
        %v465 = vld [vmem:[%s348 + $0x1d0] sm:$0xff]
        %v466 = vld [vmem:[%s348 + $0x1d8] sm:$0xff]
        %v467 = vld [vmem:[%s348 + $0x1e0] sm:$0xff]
        %v468 = vld [vmem:[%s348 + $0x1e8] sm:$0xff]
        %v469 = vld [vmem:[%s348 + $0x1f0] sm:$0xff]
        %v470 = vld [vmem:[%s348 + $0x1f8] sm:$0xff]
        %v471 = vld [vmem:[%s357] sm:$0xff]
        %v472 = vld [vmem:[%s357 + $0x8] sm:$0xff]
        %v473 = vld [vmem:[%s357 + $0x10] sm:$0xff]
        %v474 = vld [vmem:[%s357 + $0x18] sm:$0xff]
        %v475 = vld [vmem:[%s357 + $0x20] sm:$0xff]
        %v476 = vld [vmem:[%s357 + $0x28] sm:$0xff]
        %v477 = vld [vmem:[%s357 + $0x30] sm:$0xff]
        %v478 = vld [vmem:[%s357 + $0x38] sm:$0xff]
        %v479 = vld [vmem:[%s357 + $0x40] sm:$0xff]
        %v480 = vld [vmem:[%s357 + $0x48] sm:$0xff]
        %v481 = vld [vmem:[%s357 + $0x50] sm:$0xff]
        %v482 = vld [vmem:[%s357 + $0x58] sm:$0xff]
        %v483 = vld [vmem:[%s357 + $0x60] sm:$0xff]
        %v484 = vld [vmem:[%s357 + $0x68] sm:$0xff]
        %v485 = vld [vmem:[%s357 + $0x70] sm:$0xff]
        %v486 = vld [vmem:[%s357 + $0x78] sm:$0xff]
        %v487 = vld [vmem:[%s357 + $0x80] sm:$0xff]
        %v488 = vld [vmem:[%s357 + $0x88] sm:$0xff]
        %v489 = vld [vmem:[%s357 + $0x90] sm:$0xff]
        %v490 = vld [vmem:[%s357 + $0x98] sm:$0xff]
        %v491 = vld [vmem:[%s357 + $0xa0] sm:$0xff]
        %v492 = vld [vmem:[%s357 + $0xa8] sm:$0xff]
        %v493 = vld [vmem:[%s357 + $0xb0] sm:$0xff]
        %v494 = vld [vmem:[%s357 + $0xb8] sm:$0xff]
        %v495 = vld [vmem:[%s357 + $0xc0] sm:$0xff]
        %v496 = vld [vmem:[%s357 + $0xc8] sm:$0xff]
        %v497 = vld [vmem:[%s357 + $0xd0] sm:$0xff]
        %v498 = vld [vmem:[%s357 + $0xd8] sm:$0xff]
        %v499 = vld [vmem:[%s357 + $0xe0] sm:$0xff]
        %v500 = vld [vmem:[%s357 + $0xe8] sm:$0xff]
        %v501 = vld [vmem:[%s357 + $0xf0] sm:$0xff]
        %v502 = vld [vmem:[%s357 + $0xf8] sm:$0xff]
        %v503 = vld [vmem:[#allocation7] sm:$0xff]
        %v504 = vld [vmem:[#allocation7 + $0x8] sm:$0xff]
        %v505 = vld [vmem:[#allocation7 + $0x10] sm:$0xff]
        %v506 = vld [vmem:[#allocation7 + $0x18] sm:$0xff]
        %v507 = vld [vmem:[#allocation7 + $0x20] sm:$0xff]
        %v508 = vld [vmem:[#allocation7 + $0x28] sm:$0xff]
        %v509 = vld [vmem:[#allocation7 + $0x30] sm:$0xff]
        %v510 = vld [vmem:[#allocation7 + $0x38] sm:$0xff]
        %v511 = vld [vmem:[#allocation7 + $0x40] sm:$0xff]
        %v512 = vld [vmem:[#allocation7 + $0x48] sm:$0xff]
        %v513 = vld [vmem:[#allocation7 + $0x50] sm:$0xff]
        %v514 = vld [vmem:[#allocation7 + $0x58] sm:$0xff]
        %v515 = vld [vmem:[#allocation7 + $0x60] sm:$0xff]
        %v516 = vld [vmem:[#allocation7 + $0x68] sm:$0xff]
        %v517 = vld [vmem:[#allocation7 + $0x70] sm:$0xff]
        %v518 = vld [vmem:[#allocation7 + $0x78] sm:$0xff]
        %519 = vmatprep.subr.mxu0 0.0
        %520 = vmatpush1.msra.mxu0 %v503
        %521 = vmatprep.subr.mxu0 0.0
        %522 = vmatpush1.msra.mxu0 %v504
        %523 = vmatprep.subr.mxu0 0.0
        %524 = vmatpush1.msra.mxu0 %v505
        %525 = vmatprep.subr.mxu0 0.0
        %526 = vmatpush1.msra.mxu0 %v506
        %527 = vmatprep.subr.mxu0 0.0
        %528 = vmatpush1.msra.mxu0 %v507
        %529 = vmatprep.subr.mxu0 0.0
        %530 = vmatpush1.msra.mxu0 %v508
        %531 = vmatprep.subr.mxu0 0.0
        %532 = vmatpush1.msra.mxu0 %v509
        %533 = vmatprep.subr.mxu0 0.0
        %534 = vmatpush1.msra.mxu0 %v510
        %535 = vmatprep.subr.mxu0 0.0
        %536 = vmatpush1.msra.mxu0 %v511
        %537 = vmatprep.subr.mxu0 0.0
        %538 = vmatpush1.msra.mxu0 %v512
        %539 = vmatprep.subr.mxu0 0.0
        %540 = vmatpush1.msra.mxu0 %v513
        %541 = vmatprep.subr.mxu0 0.0
        %542 = vmatpush1.msra.mxu0 %v514
        %543 = vmatprep.subr.mxu0 0.0
        %544 = vmatpush1.msra.mxu0 %v515
        %545 = vmatprep.subr.mxu0 0.0
        %546 = vmatpush1.msra.mxu0 %v516
        %547 = vmatprep.subr.mxu0 0.0
        %548 = vmatpush1.msra.mxu0 %v517
        %549 = vmatprep.subr.mxu0 0.0
        %550 = vmatpush1.msra.mxu0 %v518
        %551 = vmatprep.subr.mxu0 0.0
        %552 = vmatpush1.msra.mxu0 0.0
        %553 = vmatprep.subr.mxu0 0.0
        %554 = vmatpush1.msra.mxu0 0.0
        %555 = vmatprep.subr.mxu0 0.0
        %556 = vmatpush1.msra.mxu0 0.0
        %557 = vmatprep.subr.mxu0 0.0
        %558 = vmatpush1.msra.mxu0 0.0
        %559 = vmatprep.subr.mxu0 0.0
        %560 = vmatpush1.msra.mxu0 0.0
        %561 = vmatprep.subr.mxu0 0.0
        %562 = vmatpush1.msra.mxu0 0.0
        %563 = vmatprep.subr.mxu0 0.0
        %564 = vmatpush1.msra.mxu0 0.0
        %565 = vmatprep.subr.mxu0 0.0
        %566 = vmatpush1.msra.mxu0 0.0
        %567 = vmatprep.subr.mxu0 0.0
        %568 = vmatpush1.msra.mxu0 0.0
        %569 = vmatprep.subr.mxu0 0.0
        %570 = vmatpush1.msra.mxu0 0.0
        %571 = vmatprep.subr.mxu0 0.0
        %572 = vmatpush1.msra.mxu0 0.0
        %573 = vmatprep.subr.mxu0 0.0
        %574 = vmatpush1.msra.mxu0 0.0
        %575 = vmatprep.subr.mxu0 0.0
        %576 = vmatpush1.msra.mxu0 0.0
        %577 = vmatprep.subr.mxu0 0.0
        %578 = vmatpush1.msra.mxu0 0.0
        %579 = vmatprep.subr.mxu0 0.0
        %580 = vmatpush1.msra.mxu0 0.0
        %581 = vmatprep.subr.mxu0 0.0
        %582 = vmatpush1.msra.mxu0 0.0
        %583 = vmatprep.mubr.f32.mxu0 0.0
        %584 = vmatmul.mubr.f32.gmra.mrb[0].mxu0 %v471
        %v585 = vpop.f32.mrb[0].mxu0
        %v586 = vadd.f32 0.0, %v585
        %v587 = vpop.f32.mrb[0].mxu0
        %588 = vmatprep.mubr.f32.mxu0 0.0
        %589 = vmatmul.mubr.f32.gmra.mrb[0].mxu0 %v472
        %v590 = vpop.f32.mrb[0].mxu0
        %v591 = vadd.f32 0.0, %v590
        %v592 = vpop.f32.mrb[0].mxu0
        %593 = vmatprep.mubr.f32.mxu0 0.0
        %594 = vmatmul.mubr.f32.gmra.mrb[0].mxu0 %v473
        %v595 = vpop.f32.mrb[0].mxu0
        %v596 = vadd.f32 0.0, %v595
        %v597 = vpop.f32.mrb[0].mxu0
        %598 = vmatprep.mubr.f32.mxu0 0.0
        %599 = vmatmul.mubr.f32.gmra.mrb[0].mxu0 %v474
        %v600 = vpop.f32.mrb[0].mxu0
        %v601 = vadd.f32 0.0, %v600
        %v602 = vpop.f32.mrb[0].mxu0
        %603 = vmatprep.mubr.f32.mxu0 0.0
        %604 = vmatmul.mubr.f32.gmra.mrb[0].mxu0 %v475
        %v605 = vpop.f32.mrb[0].mxu0
        %v606 = vadd.f32 0.0, %v605
        %v607 = vpop.f32.mrb[0].mxu0
        %608 = vmatprep.mubr.f32.mxu0 0.0
        %609 = vmatmul.mubr.f32.gmra.mrb[0].mxu0 %v476
        %v610 = vpop.f32.mrb[0].mxu0
        %v611 = vadd.f32 0.0, %v610
        %v612 = vpop.f32.mrb[0].mxu0
        %613 = vmatprep.mubr.f32.mxu0 0.0
        %614 = vmatmul.mubr.f32.gmra.mrb[0].mxu0 %v477
        %v615 = vpop.f32.mrb[0].mxu0
        %v616 = vadd.f32 0.0, %v615
        %v617 = vpop.f32.mrb[0].mxu0
        %618 = vmatprep.mubr.f32.mxu0 0.0
        %619 = vmatmul.mubr.f32.gmra.mrb[0].mxu0 %v478
        %v620 = vpop.f32.mrb[0].mxu0
        %v621 = vadd.f32 0.0, %v620
        %v622 = vpop.f32.mrb[0].mxu0
        %623 = vmatprep.mubr.f32.mxu0 0.0
        %624 = vmatmul.mubr.f32.gmra.mrb[0].mxu0 %v479
        %v625 = vpop.f32.mrb[0].mxu0
        %v626 = vadd.f32 0.0, %v625
        %v627 = vpop.f32.mrb[0].mxu0
        %628 = vmatprep.mubr.f32.mxu0 0.0
        %629 = vmatmul.mubr.f32.gmra.mrb[0].mxu0 %v480
        %v630 = vpop.f32.mrb[0].mxu0
        %v631 = vadd.f32 0.0, %v630
        %v632 = vpop.f32.mrb[0].mxu0
        %633 = vmatprep.mubr.f32.mxu0 0.0
        %634 = vmatmul.mubr.f32.gmra.mrb[0].mxu0 %v481
        %v635 = vpop.f32.mrb[0].mxu0
        %v636 = vadd.f32 0.0, %v635
        %v637 = vpop.f32.mrb[0].mxu0
        %638 = vmatprep.mubr.f32.mxu0 0.0
        %639 = vmatmul.mubr.f32.gmra.mrb[0].mxu0 %v482
        %v640 = vpop.f32.mrb[0].mxu0
        %v641 = vadd.f32 0.0, %v640
        %v642 = vpop.f32.mrb[0].mxu0
        %643 = vmatprep.mubr.f32.mxu0 0.0
        %644 = vmatmul.mubr.f32.gmra.mrb[0].mxu0 %v483
        %v645 = vpop.f32.mrb[0].mxu0
        %v646 = vadd.f32 0.0, %v645
        %v647 = vpop.f32.mrb[0].mxu0
        %648 = vmatprep.mubr.f32.mxu0 0.0
        %649 = vmatmul.mubr.f32.gmra.mrb[0].mxu0 %v484
        %v650 = vpop.f32.mrb[0].mxu0
        %v651 = vadd.f32 0.0, %v650
        %v652 = vpop.f32.mrb[0].mxu0
        %653 = vmatprep.mubr.f32.mxu0 0.0
        %654 = vmatmul.mubr.f32.gmra.mrb[0].mxu0 %v485
        %v655 = vpop.f32.mrb[0].mxu0
        %v656 = vadd.f32 0.0, %v655
        %v657 = vpop.f32.mrb[0].mxu0
        %658 = vmatprep.mubr.f32.mxu0 0.0
        %659 = vmatmul.mubr.f32.gmra.mrb[0].mxu0 %v486
        %v660 = vpop.f32.mrb[0].mxu0
        %v661 = vadd.f32 0.0, %v660
        %v662 = vpop.f32.mrb[0].mxu0
        %663 = vmatprep.mubr.f32.mxu0 0.0
        %664 = vmatmul.mubr.f32.gmra.mrb[0].mxu0 %v487
        %v665 = vpop.f32.mrb[0].mxu0
        %v666 = vadd.f32 0.0, %v665
        %v667 = vpop.f32.mrb[0].mxu0
        %668 = vmatprep.mubr.f32.mxu0 0.0
        %669 = vmatmul.mubr.f32.gmra.mrb[0].mxu0 %v488
        %v670 = vpop.f32.mrb[0].mxu0
        %v671 = vadd.f32 0.0, %v670
        %v672 = vpop.f32.mrb[0].mxu0
        %673 = vmatprep.mubr.f32.mxu0 0.0
        %674 = vmatmul.mubr.f32.gmra.mrb[0].mxu0 %v489
        %v675 = vpop.f32.mrb[0].mxu0
        %v676 = vadd.f32 0.0, %v675
        %v677 = vpop.f32.mrb[0].mxu0
        %678 = vmatprep.mubr.f32.mxu0 0.0
        %679 = vmatmul.mubr.f32.gmra.mrb[0].mxu0 %v490
        %v680 = vpop.f32.mrb[0].mxu0
        %v681 = vadd.f32 0.0, %v680
        %v682 = vpop.f32.mrb[0].mxu0
        %683 = vmatprep.mubr.f32.mxu0 0.0
        %684 = vmatmul.mubr.f32.gmra.mrb[0].mxu0 %v491
        %v685 = vpop.f32.mrb[0].mxu0
        %v686 = vadd.f32 0.0, %v685
        %v687 = vpop.f32.mrb[0].mxu0
        %688 = vmatprep.mubr.f32.mxu0 0.0
        %689 = vmatmul.mubr.f32.gmra.mrb[0].mxu0 %v492
        %v690 = vpop.f32.mrb[0].mxu0
        %v691 = vadd.f32 0.0, %v690
        %v692 = vpop.f32.mrb[0].mxu0
        %693 = vmatprep.mubr.f32.mxu0 0.0
        %694 = vmatmul.mubr.f32.gmra.mrb[0].mxu0 %v493
        %v695 = vpop.f32.mrb[0].mxu0
        %v696 = vadd.f32 0.0, %v695
        %v697 = vpop.f32.mrb[0].mxu0
        %698 = vmatprep.mubr.f32.mxu0 0.0
        %699 = vmatmul.mubr.f32.gmra.mrb[0].mxu0 %v494
        %v700 = vpop.f32.mrb[0].mxu0
        %v701 = vadd.f32 0.0, %v700
        %v702 = vpop.f32.mrb[0].mxu0
        %703 = vmatprep.mubr.f32.mxu0 0.0
        %704 = vmatmul.mubr.f32.gmra.mrb[0].mxu0 %v495
        %v705 = vpop.f32.mrb[0].mxu0
        %v706 = vadd.f32 0.0, %v705
        %v707 = vpop.f32.mrb[0].mxu0
        %708 = vmatprep.mubr.f32.mxu0 0.0
        %709 = vmatmul.mubr.f32.gmra.mrb[0].mxu0 %v496
        %v710 = vpop.f32.mrb[0].mxu0
        %v711 = vadd.f32 0.0, %v710
        %v712 = vpop.f32.mrb[0].mxu0
        %713 = vmatprep.mubr.f32.mxu0 0.0
        %714 = vmatmul.mubr.f32.gmra.mrb[0].mxu0 %v497
        %v715 = vpop.f32.mrb[0].mxu0
        %v716 = vadd.f32 0.0, %v715
        %v717 = vpop.f32.mrb[0].mxu0
        %718 = vmatprep.mubr.f32.mxu0 0.0
        %719 = vmatmul.mubr.f32.gmra.mrb[0].mxu0 %v498
        %v720 = vpop.f32.mrb[0].mxu0
        %v721 = vadd.f32 0.0, %v720
        %v722 = vpop.f32.mrb[0].mxu0
        %723 = vmatprep.mubr.f32.mxu0 0.0
        %724 = vmatmul.mubr.f32.gmra.mrb[0].mxu0 %v499
        %v725 = vpop.f32.mrb[0].mxu0
        %v726 = vadd.f32 0.0, %v725
        %v727 = vpop.f32.mrb[0].mxu0
        %728 = vmatprep.mubr.f32.mxu0 0.0
        %729 = vmatmul.mubr.f32.gmra.mrb[0].mxu0 %v500
        %v730 = vpop.f32.mrb[0].mxu0
        %v731 = vadd.f32 0.0, %v730
        %v732 = vpop.f32.mrb[0].mxu0
        %733 = vmatprep.mubr.f32.mxu0 0.0
        %734 = vmatmul.mubr.f32.gmra.mrb[0].mxu0 %v501
        %v735 = vpop.f32.mrb[0].mxu0
        %v736 = vadd.f32 0.0, %v735
        %v737 = vpop.f32.mrb[0].mxu0
        %738 = vmatprep.mubr.f32.mxu0 0.0
        %739 = vmatmul.mubr.f32.gmra.mrb[0].mxu0 %v502
        %v740 = vpop.f32.mrb[0].mxu0
        %v741 = vadd.f32 0.0, %v740
        %v742 = vpop.f32.mrb[0].mxu0
        %743 = vdwg.mxu0
        %v744 = vld [vmem:[%s3] sm:$0x1]
        %v746 = vlaneseq
        %v747 = vshrl.u32 %v746, 7
        %v748 = vsub.s32 0, %v747
        %v749 = vrot.slane %v744, %v748
        %751 = vmatprep.subr.mxu0 0.0
        %752 = vmatpush1.msra.mxu0 %v586
        %753 = vmatprep.subr.mxu0 0.0
        %754 = vmatpush1.msra.mxu0 %v591
        %755 = vmatprep.subr.mxu0 0.0
        %756 = vmatpush1.msra.mxu0 %v596
        %757 = vmatprep.subr.mxu0 0.0
        %758 = vmatpush1.msra.mxu0 %v601
        %759 = vmatprep.subr.mxu0 0.0
        %760 = vmatpush1.msra.mxu0 %v606
        %761 = vmatprep.subr.mxu0 0.0
        %762 = vmatpush1.msra.mxu0 %v611
        %763 = vmatprep.subr.mxu0 0.0
        %764 = vmatpush1.msra.mxu0 %v616
        %765 = vmatprep.subr.mxu0 0.0
        %766 = vmatpush1.msra.mxu0 %v621
        %767 = vmatprep.subr.mxu0 0.0
        %768 = vmatpush1.msra.mxu0 %v626
        %769 = vmatprep.subr.mxu0 0.0
        %770 = vmatpush1.msra.mxu0 %v631
        %771 = vmatprep.subr.mxu0 0.0
        %772 = vmatpush1.msra.mxu0 %v636
        %773 = vmatprep.subr.mxu0 0.0
        %774 = vmatpush1.msra.mxu0 %v641
        %775 = vmatprep.subr.mxu0 0.0
        %776 = vmatpush1.msra.mxu0 %v646
        %777 = vmatprep.subr.mxu0 0.0
        %778 = vmatpush1.msra.mxu0 %v651
        %779 = vmatprep.subr.mxu0 0.0
        %780 = vmatpush1.msra.mxu0 %v656
        %781 = vmatprep.subr.mxu0 0.0
        %782 = vmatpush1.msra.mxu0 %v661
        %783 = vmatprep.subr.mxu0 0.0
        %784 = vmatpush1.msra.mxu0 %v666
        %785 = vmatprep.subr.mxu0 0.0
        %786 = vmatpush1.msra.mxu0 %v671
        %787 = vmatprep.subr.mxu0 0.0
        %788 = vmatpush1.msra.mxu0 %v676
        %789 = vmatprep.subr.mxu0 0.0
        %790 = vmatpush1.msra.mxu0 %v681
        %791 = vmatprep.subr.mxu0 0.0
        %792 = vmatpush1.msra.mxu0 %v686
        %793 = vmatprep.subr.mxu0 0.0
        %794 = vmatpush1.msra.mxu0 %v691
        %795 = vmatprep.subr.mxu0 0.0
        %796 = vmatpush1.msra.mxu0 %v696
        %797 = vmatprep.subr.mxu0 0.0
        %798 = vmatpush1.msra.mxu0 %v701
        %799 = vmatprep.subr.mxu0 0.0
        %800 = vmatpush1.msra.mxu0 %v706
        %801 = vmatprep.subr.mxu0 0.0
        %802 = vmatpush1.msra.mxu0 %v711
        %803 = vmatprep.subr.mxu0 0.0
        %804 = vmatpush1.msra.mxu0 %v716
        %805 = vmatprep.subr.mxu0 0.0
        %806 = vmatpush1.msra.mxu0 %v721
        %807 = vmatprep.subr.mxu0 0.0
        %808 = vmatpush1.msra.mxu0 %v726
        %809 = vmatprep.subr.mxu0 0.0
        %810 = vmatpush1.msra.mxu0 %v731
        %811 = vmatprep.subr.mxu0 0.0
        %812 = vmatpush1.msra.mxu0 %v736
        %813 = vmatprep.subr.mxu0 0.0
        %814 = vmatpush1.msra.mxu0 %v741
        %815 = vmatprep.mubr.f32.mxu0 %v408
        %816 = vmatmul.mubr.f32.gmra.mrb[0].mxu0 %v407
        %v817 = vpop.f32.mrb[0].mxu0
        %v818 = vadd.f32 %v749, %v817
        %v819 = vpop.f32.mrb[0].mxu0
        %820 = vmatprep.mubr.f32.mxu0 %v410
        %821 = vmatmul.mubr.f32.gmra.mrb[0].mxu0 %v409
        %v822 = vpop.f32.mrb[0].mxu0
        %v823 = vadd.f32 %v749, %v822
        %v824 = vpop.f32.mrb[0].mxu0
        %825 = vmatprep.mubr.f32.mxu0 %v412
        %826 = vmatmul.mubr.f32.gmra.mrb[0].mxu0 %v411
        %v827 = vpop.f32.mrb[0].mxu0
        %v828 = vadd.f32 %v749, %v827
        %v829 = vpop.f32.mrb[0].mxu0
        %830 = vmatprep.mubr.f32.mxu0 %v414
        %831 = vmatmul.mubr.f32.gmra.mrb[0].mxu0 %v413
        %v832 = vpop.f32.mrb[0].mxu0
        %v833 = vadd.f32 %v749, %v832
        %v834 = vpop.f32.mrb[0].mxu0
        %835 = vmatprep.mubr.f32.mxu0 %v416
        %836 = vmatmul.mubr.f32.gmra.mrb[0].mxu0 %v415
        %v837 = vpop.f32.mrb[0].mxu0
        %v838 = vadd.f32 %v749, %v837
        %v839 = vpop.f32.mrb[0].mxu0
        %840 = vmatprep.mubr.f32.mxu0 %v418
        %841 = vmatmul.mubr.f32.gmra.mrb[0].mxu0 %v417
        %v842 = vpop.f32.mrb[0].mxu0
        %v843 = vadd.f32 %v749, %v842
        %v844 = vpop.f32.mrb[0].mxu0
        %845 = vmatprep.mubr.f32.mxu0 %v420
        %846 = vmatmul.mubr.f32.gmra.mrb[0].mxu0 %v419
        %v847 = vpop.f32.mrb[0].mxu0
        %v848 = vadd.f32 %v749, %v847
        %v849 = vpop.f32.mrb[0].mxu0
        %850 = vmatprep.mubr.f32.mxu0 %v422
        %851 = vmatmul.mubr.f32.gmra.mrb[0].mxu0 %v421
        %v852 = vpop.f32.mrb[0].mxu0
        %v853 = vadd.f32 %v749, %v852
        %v854 = vpop.f32.mrb[0].mxu0
        %855 = vmatprep.mubr.f32.mxu0 %v424
        %856 = vmatmul.mubr.f32.gmra.mrb[0].mxu0 %v423
        %v857 = vpop.f32.mrb[0].mxu0
        %v858 = vadd.f32 %v749, %v857
        %v859 = vpop.f32.mrb[0].mxu0
        %860 = vmatprep.mubr.f32.mxu0 %v426
        %861 = vmatmul.mubr.f32.gmra.mrb[0].mxu0 %v425
        %v862 = vpop.f32.mrb[0].mxu0
        %v863 = vadd.f32 %v749, %v862
        %v864 = vpop.f32.mrb[0].mxu0
        %865 = vmatprep.mubr.f32.mxu0 %v428
        %866 = vmatmul.mubr.f32.gmra.mrb[0].mxu0 %v427
        %v867 = vpop.f32.mrb[0].mxu0
        %v868 = vadd.f32 %v749, %v867
        %v869 = vpop.f32.mrb[0].mxu0
        %870 = vmatprep.mubr.f32.mxu0 %v430
        %871 = vmatmul.mubr.f32.gmra.mrb[0].mxu0 %v429
        %v872 = vpop.f32.mrb[0].mxu0
        %v873 = vadd.f32 %v749, %v872
        %v874 = vpop.f32.mrb[0].mxu0
        %875 = vmatprep.mubr.f32.mxu0 %v432
        %876 = vmatmul.mubr.f32.gmra.mrb[0].mxu0 %v431
        %v877 = vpop.f32.mrb[0].mxu0
        %v878 = vadd.f32 %v749, %v877
        %v879 = vpop.f32.mrb[0].mxu0
        %880 = vmatprep.mubr.f32.mxu0 %v434
        %881 = vmatmul.mubr.f32.gmra.mrb[0].mxu0 %v433
        %v882 = vpop.f32.mrb[0].mxu0
        %v883 = vadd.f32 %v749, %v882
        %v884 = vpop.f32.mrb[0].mxu0
        %885 = vmatprep.mubr.f32.mxu0 %v436
        %886 = vmatmul.mubr.f32.gmra.mrb[0].mxu0 %v435
        %v887 = vpop.f32.mrb[0].mxu0
        %v888 = vadd.f32 %v749, %v887
        %v889 = vpop.f32.mrb[0].mxu0
        %890 = vmatprep.mubr.f32.mxu0 %v438
        %891 = vmatmul.mubr.f32.gmra.mrb[0].mxu0 %v437
        %v892 = vpop.f32.mrb[0].mxu0
        %v893 = vadd.f32 %v749, %v892
        %v894 = vpop.f32.mrb[0].mxu0
        %895 = vmatprep.mubr.f32.mxu0 %v440
        %896 = vmatmul.mubr.f32.gmra.mrb[0].mxu0 %v439
        %v897 = vpop.f32.mrb[0].mxu0
        %v898 = vadd.f32 %v749, %v897
        %v899 = vpop.f32.mrb[0].mxu0
        %900 = vmatprep.mubr.f32.mxu0 %v442
        %901 = vmatmul.mubr.f32.gmra.mrb[0].mxu0 %v441
        %v902 = vpop.f32.mrb[0].mxu0
        %v903 = vadd.f32 %v749, %v902
        %v904 = vpop.f32.mrb[0].mxu0
        %905 = vmatprep.mubr.f32.mxu0 %v444
        %906 = vmatmul.mubr.f32.gmra.mrb[0].mxu0 %v443
        %v907 = vpop.f32.mrb[0].mxu0
        %v908 = vadd.f32 %v749, %v907
        %v909 = vpop.f32.mrb[0].mxu0
        %910 = vmatprep.mubr.f32.mxu0 %v446
        %911 = vmatmul.mubr.f32.gmra.mrb[0].mxu0 %v445
        %v912 = vpop.f32.mrb[0].mxu0
        %v913 = vadd.f32 %v749, %v912
        %v914 = vpop.f32.mrb[0].mxu0
        %915 = vmatprep.mubr.f32.mxu0 %v448
        %916 = vmatmul.mubr.f32.gmra.mrb[0].mxu0 %v447
        %v917 = vpop.f32.mrb[0].mxu0
        %v918 = vadd.f32 %v749, %v917
        %v919 = vpop.f32.mrb[0].mxu0
        %920 = vmatprep.mubr.f32.mxu0 %v450
        %921 = vmatmul.mubr.f32.gmra.mrb[0].mxu0 %v449
        %v922 = vpop.f32.mrb[0].mxu0
        %v923 = vadd.f32 %v749, %v922
        %v924 = vpop.f32.mrb[0].mxu0
        %925 = vmatprep.mubr.f32.mxu0 %v452
        %926 = vmatmul.mubr.f32.gmra.mrb[0].mxu0 %v451
        %v927 = vpop.f32.mrb[0].mxu0
        %v928 = vadd.f32 %v749, %v927
        %v929 = vpop.f32.mrb[0].mxu0
        %930 = vmatprep.mubr.f32.mxu0 %v454
        %931 = vmatmul.mubr.f32.gmra.mrb[0].mxu0 %v453
        %v932 = vpop.f32.mrb[0].mxu0
        %v933 = vadd.f32 %v749, %v932
        %v934 = vpop.f32.mrb[0].mxu0
        %935 = vmatprep.mubr.f32.mxu0 %v456
        %936 = vmatmul.mubr.f32.gmra.mrb[0].mxu0 %v455
        %v937 = vpop.f32.mrb[0].mxu0
        %v938 = vadd.f32 %v749, %v937
        %v939 = vpop.f32.mrb[0].mxu0
        %940 = vmatprep.mubr.f32.mxu0 %v458
        %941 = vmatmul.mubr.f32.gmra.mrb[0].mxu0 %v457
        %v942 = vpop.f32.mrb[0].mxu0
        %v943 = vadd.f32 %v749, %v942
        %v944 = vpop.f32.mrb[0].mxu0
        %945 = vmatprep.mubr.f32.mxu0 %v460
        %946 = vmatmul.mubr.f32.gmra.mrb[0].mxu0 %v459
        %v947 = vpop.f32.mrb[0].mxu0
        %v948 = vadd.f32 %v749, %v947
        %v949 = vpop.f32.mrb[0].mxu0
        %950 = vmatprep.mubr.f32.mxu0 %v462
        %951 = vmatmul.mubr.f32.gmra.mrb[0].mxu0 %v461
        %v952 = vpop.f32.mrb[0].mxu0
        %v953 = vadd.f32 %v749, %v952
        %v954 = vpop.f32.mrb[0].mxu0
        %955 = vmatprep.mubr.f32.mxu0 %v464
        %956 = vmatmul.mubr.f32.gmra.mrb[0].mxu0 %v463
        %v957 = vpop.f32.mrb[0].mxu0
        %v958 = vadd.f32 %v749, %v957
        %v959 = vpop.f32.mrb[0].mxu0
        %960 = vmatprep.mubr.f32.mxu0 %v466
        %961 = vmatmul.mubr.f32.gmra.mrb[0].mxu0 %v465
        %v962 = vpop.f32.mrb[0].mxu0
        %v963 = vadd.f32 %v749, %v962
        %v964 = vpop.f32.mrb[0].mxu0
        %965 = vmatprep.mubr.f32.mxu0 %v468
        %966 = vmatmul.mubr.f32.gmra.mrb[0].mxu0 %v467
        %v967 = vpop.f32.mrb[0].mxu0
        %v968 = vadd.f32 %v749, %v967
        %v969 = vpop.f32.mrb[0].mxu0
        %970 = vmatprep.mubr.f32.mxu0 %v470
        %971 = vmatmul.mubr.f32.gmra.mrb[0].mxu0 %v469
        %v972 = vpop.f32.mrb[0].mxu0
        %v973 = vadd.f32 %v749, %v972
        %v974 = vpop.f32.mrb[0].mxu0
        %975 = vdwg.mxu0
        %v976 = vmax.f32 %v818, 0.0
        %v977 = vmax.f32 %v823, 0.0
        %v978 = vmax.f32 %v828, 0.0
        %v979 = vmax.f32 %v833, 0.0
        %v980 = vmax.f32 %v838, 0.0
        %v981 = vmax.f32 %v843, 0.0
        %v982 = vmax.f32 %v848, 0.0
        %v983 = vmax.f32 %v853, 0.0
        %v984 = vmax.f32 %v858, 0.0
        %v985 = vmax.f32 %v863, 0.0
        %v986 = vmax.f32 %v868, 0.0
        %v987 = vmax.f32 %v873, 0.0
        %v988 = vmax.f32 %v878, 0.0
        %v989 = vmax.f32 %v883, 0.0
        %v990 = vmax.f32 %v888, 0.0
        %v991 = vmax.f32 %v893, 0.0
        %v992 = vmax.f32 %v898, 0.0
        %v993 = vmax.f32 %v903, 0.0
        %v994 = vmax.f32 %v908, 0.0
        %v995 = vmax.f32 %v913, 0.0
        %v996 = vmax.f32 %v918, 0.0
        %v997 = vmax.f32 %v923, 0.0
        %v998 = vmax.f32 %v928, 0.0
        %v999 = vmax.f32 %v933, 0.0
        %v1000 = vmax.f32 %v938, 0.0
        %v1001 = vmax.f32 %v943, 0.0
        %v1002 = vmax.f32 %v948, 0.0
        %v1003 = vmax.f32 %v953, 0.0
        %v1004 = vmax.f32 %v958, 0.0
        %v1005 = vmax.f32 %v963, 0.0
        %v1006 = vmax.f32 %v968, 0.0
        %v1007 = vmax.f32 %v973, 0.0
        %v1008 = vld [vmem:[#allocation8] sm:$0xff]
        %v1009 = vld [vmem:[#allocation8 + $0x8] sm:$0xff]
        %v1010 = vld [vmem:[#allocation8 + $0x10] sm:$0xff]
        %v1011 = vld [vmem:[#allocation8 + $0x18] sm:$0xff]
        %v1012 = vld [vmem:[#allocation8 + $0x20] sm:$0xff]
        %v1013 = vld [vmem:[#allocation8 + $0x28] sm:$0xff]
        %v1014 = vld [vmem:[#allocation8 + $0x30] sm:$0xff]
        %v1015 = vld [vmem:[#allocation8 + $0x38] sm:$0xff]
        %v1016 = vld [vmem:[#allocation8 + $0x40] sm:$0xff]
        %v1017 = vld [vmem:[#allocation8 + $0x48] sm:$0xff]
        %v1018 = vld [vmem:[#allocation8 + $0x50] sm:$0xff]
        %v1019 = vld [vmem:[#allocation8 + $0x58] sm:$0xff]
        %v1020 = vld [vmem:[#allocation8 + $0x60] sm:$0xff]
        %v1021 = vld [vmem:[#allocation8 + $0x68] sm:$0xff]
        %v1022 = vld [vmem:[#allocation8 + $0x70] sm:$0xff]
        %v1023 = vld [vmem:[#allocation8 + $0x78] sm:$0xff]
        %1024 = vmatprep.subr.mxu0 0.0
        %1025 = vmatpush1.msra.mxu0 %v1008
        %1026 = vmatprep.subr.mxu0 0.0
        %1027 = vmatpush1.msra.mxu0 %v1009
        %1028 = vmatprep.subr.mxu0 0.0
        %1029 = vmatpush1.msra.mxu0 %v1010
        %1030 = vmatprep.subr.mxu0 0.0
        %1031 = vmatpush1.msra.mxu0 %v1011
        %1032 = vmatprep.subr.mxu0 0.0
        %1033 = vmatpush1.msra.mxu0 %v1012
        %1034 = vmatprep.subr.mxu0 0.0
        %1035 = vmatpush1.msra.mxu0 %v1013
        %1036 = vmatprep.subr.mxu0 0.0
        %1037 = vmatpush1.msra.mxu0 %v1014
        %1038 = vmatprep.subr.mxu0 0.0
        %1039 = vmatpush1.msra.mxu0 %v1015
        %1040 = vmatprep.subr.mxu0 0.0
        %1041 = vmatpush1.msra.mxu0 %v1016
        %1042 = vmatprep.subr.mxu0 0.0
        %1043 = vmatpush1.msra.mxu0 %v1017
        %1044 = vmatprep.subr.mxu0 0.0
        %1045 = vmatpush1.msra.mxu0 %v1018
        %1046 = vmatprep.subr.mxu0 0.0
        %1047 = vmatpush1.msra.mxu0 %v1019
        %1048 = vmatprep.subr.mxu0 0.0
        %1049 = vmatpush1.msra.mxu0 %v1020
        %1050 = vmatprep.subr.mxu0 0.0
        %1051 = vmatpush1.msra.mxu0 %v1021
        %1052 = vmatprep.subr.mxu0 0.0
        %1053 = vmatpush1.msra.mxu0 %v1022
        %1054 = vmatprep.subr.mxu0 0.0
        %1055 = vmatpush1.msra.mxu0 %v1023
        %1056 = vmatprep.subr.mxu0 0.0
        %1057 = vmatpush1.msra.mxu0 0.0
        %1058 = vmatprep.subr.mxu0 0.0
        %1059 = vmatpush1.msra.mxu0 0.0
        %1060 = vmatprep.subr.mxu0 0.0
        %1061 = vmatpush1.msra.mxu0 0.0
        %1062 = vmatprep.subr.mxu0 0.0
        %1063 = vmatpush1.msra.mxu0 0.0
        %1064 = vmatprep.subr.mxu0 0.0
        %1065 = vmatpush1.msra.mxu0 0.0
        %1066 = vmatprep.subr.mxu0 0.0
        %1067 = vmatpush1.msra.mxu0 0.0
        %1068 = vmatprep.subr.mxu0 0.0
        %1069 = vmatpush1.msra.mxu0 0.0
        %1070 = vmatprep.subr.mxu0 0.0
        %1071 = vmatpush1.msra.mxu0 0.0
        %1072 = vmatprep.subr.mxu0 0.0
        %1073 = vmatpush1.msra.mxu0 0.0
        %1074 = vmatprep.subr.mxu0 0.0
        %1075 = vmatpush1.msra.mxu0 0.0
        %1076 = vmatprep.subr.mxu0 0.0
        %1077 = vmatpush1.msra.mxu0 0.0
        %1078 = vmatprep.subr.mxu0 0.0
        %1079 = vmatpush1.msra.mxu0 0.0
        %1080 = vmatprep.subr.mxu0 0.0
        %1081 = vmatpush1.msra.mxu0 0.0
        %1082 = vmatprep.subr.mxu0 0.0
        %1083 = vmatpush1.msra.mxu0 0.0
        %1084 = vmatprep.subr.mxu0 0.0
        %1085 = vmatpush1.msra.mxu0 0.0
        %1086 = vmatprep.subr.mxu0 0.0
        %1087 = vmatpush1.msra.mxu0 0.0
        %1088 = vmatprep.mubr.f32.mxu0 0.0
        %1089 = vmatmul.mubr.f32.gmra.mrb[0].mxu0 %v976
        %v1090 = vpop.f32.mrb[0].mxu0
        %v1091 = vadd.f32 0.0, %v1090
        %v1092 = vpop.f32.mrb[0].mxu0
        %1093 = vmatprep.mubr.f32.mxu0 0.0
        %1094 = vmatmul.mubr.f32.gmra.mrb[0].mxu0 %v977
        %v1095 = vpop.f32.mrb[0].mxu0
        %v1096 = vadd.f32 0.0, %v1095
        %v1097 = vpop.f32.mrb[0].mxu0
        %1098 = vmatprep.mubr.f32.mxu0 0.0
        %1099 = vmatmul.mubr.f32.gmra.mrb[0].mxu0 %v978
        %v1100 = vpop.f32.mrb[0].mxu0
        %v1101 = vadd.f32 0.0, %v1100
        %v1102 = vpop.f32.mrb[0].mxu0
        %1103 = vmatprep.mubr.f32.mxu0 0.0
        %1104 = vmatmul.mubr.f32.gmra.mrb[0].mxu0 %v979
        %v1105 = vpop.f32.mrb[0].mxu0
        %v1106 = vadd.f32 0.0, %v1105
        %v1107 = vpop.f32.mrb[0].mxu0
        %1108 = vmatprep.mubr.f32.mxu0 0.0
        %1109 = vmatmul.mubr.f32.gmra.mrb[0].mxu0 %v980
        %v1110 = vpop.f32.mrb[0].mxu0
        %v1111 = vadd.f32 0.0, %v1110
        %v1112 = vpop.f32.mrb[0].mxu0
        %1113 = vmatprep.mubr.f32.mxu0 0.0
        %1114 = vmatmul.mubr.f32.gmra.mrb[0].mxu0 %v981
        %v1115 = vpop.f32.mrb[0].mxu0
        %v1116 = vadd.f32 0.0, %v1115
        %v1117 = vpop.f32.mrb[0].mxu0
        %1118 = vmatprep.mubr.f32.mxu0 0.0
        %1119 = vmatmul.mubr.f32.gmra.mrb[0].mxu0 %v982
        %v1120 = vpop.f32.mrb[0].mxu0
        %v1121 = vadd.f32 0.0, %v1120
        %v1122 = vpop.f32.mrb[0].mxu0
        %1123 = vmatprep.mubr.f32.mxu0 0.0
        %1124 = vmatmul.mubr.f32.gmra.mrb[0].mxu0 %v983
        %v1125 = vpop.f32.mrb[0].mxu0
        %v1126 = vadd.f32 0.0, %v1125
        %v1127 = vpop.f32.mrb[0].mxu0
        %1128 = vmatprep.mubr.f32.mxu0 0.0
        %1129 = vmatmul.mubr.f32.gmra.mrb[0].mxu0 %v984
        %v1130 = vpop.f32.mrb[0].mxu0
        %v1131 = vadd.f32 0.0, %v1130
        %v1132 = vpop.f32.mrb[0].mxu0
        %1133 = vmatprep.mubr.f32.mxu0 0.0
        %1134 = vmatmul.mubr.f32.gmra.mrb[0].mxu0 %v985
        %v1135 = vpop.f32.mrb[0].mxu0
        %v1136 = vadd.f32 0.0, %v1135
        %v1137 = vpop.f32.mrb[0].mxu0
        %1138 = vmatprep.mubr.f32.mxu0 0.0
        %1139 = vmatmul.mubr.f32.gmra.mrb[0].mxu0 %v986
        %v1140 = vpop.f32.mrb[0].mxu0
        %v1141 = vadd.f32 0.0, %v1140
        %v1142 = vpop.f32.mrb[0].mxu0
        %1143 = vmatprep.mubr.f32.mxu0 0.0
        %1144 = vmatmul.mubr.f32.gmra.mrb[0].mxu0 %v987
        %v1145 = vpop.f32.mrb[0].mxu0
        %v1146 = vadd.f32 0.0, %v1145
        %v1147 = vpop.f32.mrb[0].mxu0
        %1148 = vmatprep.mubr.f32.mxu0 0.0
        %1149 = vmatmul.mubr.f32.gmra.mrb[0].mxu0 %v988
        %v1150 = vpop.f32.mrb[0].mxu0
        %v1151 = vadd.f32 0.0, %v1150
        %v1152 = vpop.f32.mrb[0].mxu0
        %1153 = vmatprep.mubr.f32.mxu0 0.0
        %1154 = vmatmul.mubr.f32.gmra.mrb[0].mxu0 %v989
        %v1155 = vpop.f32.mrb[0].mxu0
        %v1156 = vadd.f32 0.0, %v1155
        %v1157 = vpop.f32.mrb[0].mxu0
        %1158 = vmatprep.mubr.f32.mxu0 0.0
        %1159 = vmatmul.mubr.f32.gmra.mrb[0].mxu0 %v990
        %v1160 = vpop.f32.mrb[0].mxu0
        %v1161 = vadd.f32 0.0, %v1160
        %v1162 = vpop.f32.mrb[0].mxu0
        %1163 = vmatprep.mubr.f32.mxu0 0.0
        %1164 = vmatmul.mubr.f32.gmra.mrb[0].mxu0 %v991
        %v1165 = vpop.f32.mrb[0].mxu0
        %v1166 = vadd.f32 0.0, %v1165
        %v1167 = vpop.f32.mrb[0].mxu0
        %1168 = vmatprep.mubr.f32.mxu0 0.0
        %1169 = vmatmul.mubr.f32.gmra.mrb[0].mxu0 %v992
        %v1170 = vpop.f32.mrb[0].mxu0
        %v1171 = vadd.f32 0.0, %v1170
        %v1172 = vpop.f32.mrb[0].mxu0
        %1173 = vmatprep.mubr.f32.mxu0 0.0
        %1174 = vmatmul.mubr.f32.gmra.mrb[0].mxu0 %v993
        %v1175 = vpop.f32.mrb[0].mxu0
        %v1176 = vadd.f32 0.0, %v1175
        %v1177 = vpop.f32.mrb[0].mxu0
        %1178 = vmatprep.mubr.f32.mxu0 0.0
        %1179 = vmatmul.mubr.f32.gmra.mrb[0].mxu0 %v994
        %v1180 = vpop.f32.mrb[0].mxu0
        %v1181 = vadd.f32 0.0, %v1180
        %v1182 = vpop.f32.mrb[0].mxu0
        %1183 = vmatprep.mubr.f32.mxu0 0.0
        %1184 = vmatmul.mubr.f32.gmra.mrb[0].mxu0 %v995
        %v1185 = vpop.f32.mrb[0].mxu0
        %v1186 = vadd.f32 0.0, %v1185
        %v1187 = vpop.f32.mrb[0].mxu0
        %1188 = vmatprep.mubr.f32.mxu0 0.0
        %1189 = vmatmul.mubr.f32.gmra.mrb[0].mxu0 %v996
        %v1190 = vpop.f32.mrb[0].mxu0
        %v1191 = vadd.f32 0.0, %v1190
        %v1192 = vpop.f32.mrb[0].mxu0
        %1193 = vmatprep.mubr.f32.mxu0 0.0
        %1194 = vmatmul.mubr.f32.gmra.mrb[0].mxu0 %v997
        %v1195 = vpop.f32.mrb[0].mxu0
        %v1196 = vadd.f32 0.0, %v1195
        %v1197 = vpop.f32.mrb[0].mxu0
        %1198 = vmatprep.mubr.f32.mxu0 0.0
        %1199 = vmatmul.mubr.f32.gmra.mrb[0].mxu0 %v998
        %v1200 = vpop.f32.mrb[0].mxu0
        %v1201 = vadd.f32 0.0, %v1200
        %v1202 = vpop.f32.mrb[0].mxu0
        %1203 = vmatprep.mubr.f32.mxu0 0.0
        %1204 = vmatmul.mubr.f32.gmra.mrb[0].mxu0 %v999
        %v1205 = vpop.f32.mrb[0].mxu0
        %v1206 = vadd.f32 0.0, %v1205
        %v1207 = vpop.f32.mrb[0].mxu0
        %1208 = vmatprep.mubr.f32.mxu0 0.0
        %1209 = vmatmul.mubr.f32.gmra.mrb[0].mxu0 %v1000
        %v1210 = vpop.f32.mrb[0].mxu0
        %v1211 = vadd.f32 0.0, %v1210
        %v1212 = vpop.f32.mrb[0].mxu0
        %1213 = vmatprep.mubr.f32.mxu0 0.0
        %1214 = vmatmul.mubr.f32.gmra.mrb[0].mxu0 %v1001
        %v1215 = vpop.f32.mrb[0].mxu0
        %v1216 = vadd.f32 0.0, %v1215
        %v1217 = vpop.f32.mrb[0].mxu0
        %1218 = vmatprep.mubr.f32.mxu0 0.0
        %1219 = vmatmul.mubr.f32.gmra.mrb[0].mxu0 %v1002
        %v1220 = vpop.f32.mrb[0].mxu0
        %v1221 = vadd.f32 0.0, %v1220
        %v1222 = vpop.f32.mrb[0].mxu0
        %1223 = vmatprep.mubr.f32.mxu0 0.0
        %1224 = vmatmul.mubr.f32.gmra.mrb[0].mxu0 %v1003
        %v1225 = vpop.f32.mrb[0].mxu0
        %v1226 = vadd.f32 0.0, %v1225
        %v1227 = vpop.f32.mrb[0].mxu0
        %1228 = vmatprep.mubr.f32.mxu0 0.0
        %1229 = vmatmul.mubr.f32.gmra.mrb[0].mxu0 %v1004
        %v1230 = vpop.f32.mrb[0].mxu0
        %v1231 = vadd.f32 0.0, %v1230
        %v1232 = vpop.f32.mrb[0].mxu0
        %1233 = vmatprep.mubr.f32.mxu0 0.0
        %1234 = vmatmul.mubr.f32.gmra.mrb[0].mxu0 %v1005
        %v1235 = vpop.f32.mrb[0].mxu0
        %v1236 = vadd.f32 0.0, %v1235
        %v1237 = vpop.f32.mrb[0].mxu0
        %1238 = vmatprep.mubr.f32.mxu0 0.0
        %1239 = vmatmul.mubr.f32.gmra.mrb[0].mxu0 %v1006
        %v1240 = vpop.f32.mrb[0].mxu0
        %v1241 = vadd.f32 0.0, %v1240
        %v1242 = vpop.f32.mrb[0].mxu0
        %1243 = vmatprep.mubr.f32.mxu0 0.0
        %1244 = vmatmul.mubr.f32.gmra.mrb[0].mxu0 %v1007
        %v1245 = vpop.f32.mrb[0].mxu0
        %v1246 = vadd.f32 0.0, %v1245
        %v1247 = vpop.f32.mrb[0].mxu0
        %1248 = vdwg.mxu0
        %v1249 = vld [vmem:[%s5] sm:$0x1]
        %v1251 = vlaneseq
        %v1252 = vshrl.u32 %v1251, 7
        %v1253 = vsub.s32 0, %v1252
        %v1254 = vrot.slane %v1249, %v1253
        %1256 = vmatprep.subr.mxu0 0.0
        %1257 = vmatpush1.msra.mxu0 %v1091
        %1258 = vmatprep.subr.mxu0 0.0
        %1259 = vmatpush1.msra.mxu0 %v1096
        %1260 = vmatprep.subr.mxu0 0.0
        %1261 = vmatpush1.msra.mxu0 %v1101
        %1262 = vmatprep.subr.mxu0 0.0
        %1263 = vmatpush1.msra.mxu0 %v1106
        %1264 = vmatprep.subr.mxu0 0.0
        %1265 = vmatpush1.msra.mxu0 %v1111
        %1266 = vmatprep.subr.mxu0 0.0
        %1267 = vmatpush1.msra.mxu0 %v1116
        %1268 = vmatprep.subr.mxu0 0.0
        %1269 = vmatpush1.msra.mxu0 %v1121
        %1270 = vmatprep.subr.mxu0 0.0
        %1271 = vmatpush1.msra.mxu0 %v1126
        %1272 = vmatprep.subr.mxu0 0.0
        %1273 = vmatpush1.msra.mxu0 %v1131
        %1274 = vmatprep.subr.mxu0 0.0
        %1275 = vmatpush1.msra.mxu0 %v1136
        %1276 = vmatprep.subr.mxu0 0.0
        %1277 = vmatpush1.msra.mxu0 %v1141
        %1278 = vmatprep.subr.mxu0 0.0
        %1279 = vmatpush1.msra.mxu0 %v1146
        %1280 = vmatprep.subr.mxu0 0.0
        %1281 = vmatpush1.msra.mxu0 %v1151
        %1282 = vmatprep.subr.mxu0 0.0
        %1283 = vmatpush1.msra.mxu0 %v1156
        %1284 = vmatprep.subr.mxu0 0.0
        %1285 = vmatpush1.msra.mxu0 %v1161
        %1286 = vmatprep.subr.mxu0 0.0
        %1287 = vmatpush1.msra.mxu0 %v1166
        %1288 = vmatprep.subr.mxu0 0.0
        %1289 = vmatpush1.msra.mxu0 %v1171
        %1290 = vmatprep.subr.mxu0 0.0
        %1291 = vmatpush1.msra.mxu0 %v1176
        %1292 = vmatprep.subr.mxu0 0.0
        %1293 = vmatpush1.msra.mxu0 %v1181
        %1294 = vmatprep.subr.mxu0 0.0
        %1295 = vmatpush1.msra.mxu0 %v1186
        %1296 = vmatprep.subr.mxu0 0.0
        %1297 = vmatpush1.msra.mxu0 %v1191
        %1298 = vmatprep.subr.mxu0 0.0
        %1299 = vmatpush1.msra.mxu0 %v1196
        %1300 = vmatprep.subr.mxu0 0.0
        %1301 = vmatpush1.msra.mxu0 %v1201
        %1302 = vmatprep.subr.mxu0 0.0
        %1303 = vmatpush1.msra.mxu0 %v1206
        %1304 = vmatprep.subr.mxu0 0.0
        %1305 = vmatpush1.msra.mxu0 %v1211
        %1306 = vmatprep.subr.mxu0 0.0
        %1307 = vmatpush1.msra.mxu0 %v1216
        %1308 = vmatprep.subr.mxu0 0.0
        %1309 = vmatpush1.msra.mxu0 %v1221
        %1310 = vmatprep.subr.mxu0 0.0
        %1311 = vmatpush1.msra.mxu0 %v1226
        %1312 = vmatprep.subr.mxu0 0.0
        %1313 = vmatpush1.msra.mxu0 %v1231
        %1314 = vmatprep.subr.mxu0 0.0
        %1315 = vmatpush1.msra.mxu0 %v1236
        %1316 = vmatprep.subr.mxu0 0.0
        %1317 = vmatpush1.msra.mxu0 %v1241
        %1318 = vmatprep.subr.mxu0 0.0
        %1319 = vmatpush1.msra.mxu0 %v1246
        %1320 = vmatprep.mubr.f32.mxu0 %v408
        %1321 = vmatmul.mubr.f32.gmra.mrb[0].mxu0 %v407
        %v1322 = vpop.f32.mrb[0].mxu0
        %v1323 = vadd.f32 %v1254, %v1322
        %v1324 = vpop.f32.mrb[0].mxu0
        %1325 = vmatprep.mubr.f32.mxu0 %v410
        %1326 = vmatmul.mubr.f32.gmra.mrb[0].mxu0 %v409
        %v1327 = vpop.f32.mrb[0].mxu0
        %v1328 = vadd.f32 %v1254, %v1327
        %v1329 = vpop.f32.mrb[0].mxu0
        %1330 = vmatprep.mubr.f32.mxu0 %v412
        %1331 = vmatmul.mubr.f32.gmra.mrb[0].mxu0 %v411
        %v1332 = vpop.f32.mrb[0].mxu0
        %v1333 = vadd.f32 %v1254, %v1332
        %v1334 = vpop.f32.mrb[0].mxu0
        %1335 = vmatprep.mubr.f32.mxu0 %v414
        %1336 = vmatmul.mubr.f32.gmra.mrb[0].mxu0 %v413
        %v1337 = vpop.f32.mrb[0].mxu0
        %v1338 = vadd.f32 %v1254, %v1337
        %v1339 = vpop.f32.mrb[0].mxu0
        %1340 = vmatprep.mubr.f32.mxu0 %v416
        %1341 = vmatmul.mubr.f32.gmra.mrb[0].mxu0 %v415
        %v1342 = vpop.f32.mrb[0].mxu0
        %v1343 = vadd.f32 %v1254, %v1342
        %v1344 = vpop.f32.mrb[0].mxu0
        %1345 = vmatprep.mubr.f32.mxu0 %v418
        %1346 = vmatmul.mubr.f32.gmra.mrb[0].mxu0 %v417
        %v1347 = vpop.f32.mrb[0].mxu0
        %v1348 = vadd.f32 %v1254, %v1347
        %v1349 = vpop.f32.mrb[0].mxu0
        %1350 = vmatprep.mubr.f32.mxu0 %v420
        %1351 = vmatmul.mubr.f32.gmra.mrb[0].mxu0 %v419
        %v1352 = vpop.f32.mrb[0].mxu0
        %v1353 = vadd.f32 %v1254, %v1352
        %v1354 = vpop.f32.mrb[0].mxu0
        %1355 = vmatprep.mubr.f32.mxu0 %v422
        %1356 = vmatmul.mubr.f32.gmra.mrb[0].mxu0 %v421
        %v1357 = vpop.f32.mrb[0].mxu0
        %v1358 = vadd.f32 %v1254, %v1357
        %v1359 = vpop.f32.mrb[0].mxu0
        %1360 = vmatprep.mubr.f32.mxu0 %v424
        %1361 = vmatmul.mubr.f32.gmra.mrb[0].mxu0 %v423
        %v1362 = vpop.f32.mrb[0].mxu0
        %v1363 = vadd.f32 %v1254, %v1362
        %v1364 = vpop.f32.mrb[0].mxu0
        %1365 = vmatprep.mubr.f32.mxu0 %v426
        %1366 = vmatmul.mubr.f32.gmra.mrb[0].mxu0 %v425
        %v1367 = vpop.f32.mrb[0].mxu0
        %v1368 = vadd.f32 %v1254, %v1367
        %v1369 = vpop.f32.mrb[0].mxu0
        %1370 = vmatprep.mubr.f32.mxu0 %v428
        %1371 = vmatmul.mubr.f32.gmra.mrb[0].mxu0 %v427
        %v1372 = vpop.f32.mrb[0].mxu0
        %v1373 = vadd.f32 %v1254, %v1372
        %v1374 = vpop.f32.mrb[0].mxu0
        %1375 = vmatprep.mubr.f32.mxu0 %v430
        %1376 = vmatmul.mubr.f32.gmra.mrb[0].mxu0 %v429
        %v1377 = vpop.f32.mrb[0].mxu0
        %v1378 = vadd.f32 %v1254, %v1377
        %v1379 = vpop.f32.mrb[0].mxu0
        %1380 = vmatprep.mubr.f32.mxu0 %v432
        %1381 = vmatmul.mubr.f32.gmra.mrb[0].mxu0 %v431
        %v1382 = vpop.f32.mrb[0].mxu0
        %v1383 = vadd.f32 %v1254, %v1382
        %v1384 = vpop.f32.mrb[0].mxu0
        %1385 = vmatprep.mubr.f32.mxu0 %v434
        %1386 = vmatmul.mubr.f32.gmra.mrb[0].mxu0 %v433
        %v1387 = vpop.f32.mrb[0].mxu0
        %v1388 = vadd.f32 %v1254, %v1387
        %v1389 = vpop.f32.mrb[0].mxu0
        %1390 = vmatprep.mubr.f32.mxu0 %v436
        %1391 = vmatmul.mubr.f32.gmra.mrb[0].mxu0 %v435
        %v1392 = vpop.f32.mrb[0].mxu0
        %v1393 = vadd.f32 %v1254, %v1392
        %v1394 = vpop.f32.mrb[0].mxu0
        %1395 = vmatprep.mubr.f32.mxu0 %v438
        %1396 = vmatmul.mubr.f32.gmra.mrb[0].mxu0 %v437
        %v1397 = vpop.f32.mrb[0].mxu0
        %v1398 = vadd.f32 %v1254, %v1397
        %v1399 = vpop.f32.mrb[0].mxu0
        %1400 = vmatprep.mubr.f32.mxu0 %v440
        %1401 = vmatmul.mubr.f32.gmra.mrb[0].mxu0 %v439
        %v1402 = vpop.f32.mrb[0].mxu0
        %v1403 = vadd.f32 %v1254, %v1402
        %v1404 = vpop.f32.mrb[0].mxu0
        %1405 = vmatprep.mubr.f32.mxu0 %v442
        %1406 = vmatmul.mubr.f32.gmra.mrb[0].mxu0 %v441
        %v1407 = vpop.f32.mrb[0].mxu0
        %v1408 = vadd.f32 %v1254, %v1407
        %v1409 = vpop.f32.mrb[0].mxu0
        %1410 = vmatprep.mubr.f32.mxu0 %v444
        %1411 = vmatmul.mubr.f32.gmra.mrb[0].mxu0 %v443
        %v1412 = vpop.f32.mrb[0].mxu0
        %v1413 = vadd.f32 %v1254, %v1412
        %v1414 = vpop.f32.mrb[0].mxu0
        %1415 = vmatprep.mubr.f32.mxu0 %v446
        %1416 = vmatmul.mubr.f32.gmra.mrb[0].mxu0 %v445
        %v1417 = vpop.f32.mrb[0].mxu0
        %v1418 = vadd.f32 %v1254, %v1417
        %v1419 = vpop.f32.mrb[0].mxu0
        %1420 = vmatprep.mubr.f32.mxu0 %v448
        %1421 = vmatmul.mubr.f32.gmra.mrb[0].mxu0 %v447
        %v1422 = vpop.f32.mrb[0].mxu0
        %v1423 = vadd.f32 %v1254, %v1422
        %v1424 = vpop.f32.mrb[0].mxu0
        %1425 = vmatprep.mubr.f32.mxu0 %v450
        %1426 = vmatmul.mubr.f32.gmra.mrb[0].mxu0 %v449
        %v1427 = vpop.f32.mrb[0].mxu0
        %v1428 = vadd.f32 %v1254, %v1427
        %v1429 = vpop.f32.mrb[0].mxu0
        %1430 = vmatprep.mubr.f32.mxu0 %v452
        %1431 = vmatmul.mubr.f32.gmra.mrb[0].mxu0 %v451
        %v1432 = vpop.f32.mrb[0].mxu0
        %v1433 = vadd.f32 %v1254, %v1432
        %v1434 = vpop.f32.mrb[0].mxu0
        %1435 = vmatprep.mubr.f32.mxu0 %v454
        %1436 = vmatmul.mubr.f32.gmra.mrb[0].mxu0 %v453
        %v1437 = vpop.f32.mrb[0].mxu0
        %v1438 = vadd.f32 %v1254, %v1437
        %v1439 = vpop.f32.mrb[0].mxu0
        %1440 = vmatprep.mubr.f32.mxu0 %v456
        %1441 = vmatmul.mubr.f32.gmra.mrb[0].mxu0 %v455
        %v1442 = vpop.f32.mrb[0].mxu0
        %v1443 = vadd.f32 %v1254, %v1442
        %v1444 = vpop.f32.mrb[0].mxu0
        %1445 = vmatprep.mubr.f32.mxu0 %v458
        %1446 = vmatmul.mubr.f32.gmra.mrb[0].mxu0 %v457
        %v1447 = vpop.f32.mrb[0].mxu0
        %v1448 = vadd.f32 %v1254, %v1447
        %v1449 = vpop.f32.mrb[0].mxu0
        %1450 = vmatprep.mubr.f32.mxu0 %v460
        %1451 = vmatmul.mubr.f32.gmra.mrb[0].mxu0 %v459
        %v1452 = vpop.f32.mrb[0].mxu0
        %v1453 = vadd.f32 %v1254, %v1452
        %v1454 = vpop.f32.mrb[0].mxu0
        %1455 = vmatprep.mubr.f32.mxu0 %v462
        %1456 = vmatmul.mubr.f32.gmra.mrb[0].mxu0 %v461
        %v1457 = vpop.f32.mrb[0].mxu0
        %v1458 = vadd.f32 %v1254, %v1457
        %v1459 = vpop.f32.mrb[0].mxu0
        %1460 = vmatprep.mubr.f32.mxu0 %v464
        %1461 = vmatmul.mubr.f32.gmra.mrb[0].mxu0 %v463
        %v1462 = vpop.f32.mrb[0].mxu0
        %v1463 = vadd.f32 %v1254, %v1462
        %v1464 = vpop.f32.mrb[0].mxu0
        %1465 = vmatprep.mubr.f32.mxu0 %v466
        %1466 = vmatmul.mubr.f32.gmra.mrb[0].mxu0 %v465
        %v1467 = vpop.f32.mrb[0].mxu0
        %v1468 = vadd.f32 %v1254, %v1467
        %v1469 = vpop.f32.mrb[0].mxu0
        %1470 = vmatprep.mubr.f32.mxu0 %v468
        %1471 = vmatmul.mubr.f32.gmra.mrb[0].mxu0 %v467
        %v1472 = vpop.f32.mrb[0].mxu0
        %v1473 = vadd.f32 %v1254, %v1472
        %v1474 = vpop.f32.mrb[0].mxu0
        %1475 = vmatprep.mubr.f32.mxu0 %v470
        %1476 = vmatmul.mubr.f32.gmra.mrb[0].mxu0 %v469
        %v1477 = vpop.f32.mrb[0].mxu0
        %v1478 = vadd.f32 %v1254, %v1477
        %v1479 = vpop.f32.mrb[0].mxu0
        %1480 = vdwg.mxu0
        %v1481 = vmax.f32 %v1323, 0.0
        %v1482 = vmax.f32 %v1328, 0.0
        %v1483 = vmax.f32 %v1333, 0.0
        %v1484 = vmax.f32 %v1338, 0.0
        %v1485 = vmax.f32 %v1343, 0.0
        %v1486 = vmax.f32 %v1348, 0.0
        %v1487 = vmax.f32 %v1353, 0.0
        %v1488 = vmax.f32 %v1358, 0.0
        %v1489 = vmax.f32 %v1363, 0.0
        %v1490 = vmax.f32 %v1368, 0.0
        %v1491 = vmax.f32 %v1373, 0.0
        %v1492 = vmax.f32 %v1378, 0.0
        %v1493 = vmax.f32 %v1383, 0.0
        %v1494 = vmax.f32 %v1388, 0.0
        %v1495 = vmax.f32 %v1393, 0.0
        %v1496 = vmax.f32 %v1398, 0.0
        %v1497 = vmax.f32 %v1403, 0.0
        %v1498 = vmax.f32 %v1408, 0.0
        %v1499 = vmax.f32 %v1413, 0.0
        %v1500 = vmax.f32 %v1418, 0.0
        %v1501 = vmax.f32 %v1423, 0.0
        %v1502 = vmax.f32 %v1428, 0.0
        %v1503 = vmax.f32 %v1433, 0.0
        %v1504 = vmax.f32 %v1438, 0.0
        %v1505 = vmax.f32 %v1443, 0.0
        %v1506 = vmax.f32 %v1448, 0.0
        %v1507 = vmax.f32 %v1453, 0.0
        %v1508 = vmax.f32 %v1458, 0.0
        %v1509 = vmax.f32 %v1463, 0.0
        %v1510 = vmax.f32 %v1468, 0.0
        %v1511 = vmax.f32 %v1473, 0.0
        %v1512 = vmax.f32 %v1478, 0.0
        %v1513 = vlaneseq
        %v1514 = vshrl.u32 %v1513, 7
        %v1515 = vadd.s32 %v1514, 8
        %v1516 = vlaneseq
        %v1517 = vand.u32 %v1516, 127
        %v1518 = vadd.s32 %v1517, 128
        %v1519 = vmul.u32 %v1514, 16
        %v1520 = vmul.u32 %v1515, 16
        %vm1521 = vcmp.ge.s32.totalorder %v1517, %v1519
        %vm1522 = vcmp.ge.s32.totalorder %v1518, %v1519
        %vm1523 = vcmp.ge.s32.totalorder %v1517, %v1520
        %vm1524 = vcmp.ge.s32.totalorder %v1518, %v1520
        %v1525 = vadd.s32 %v1514, 1
        %v1526 = vadd.s32 %v1515, 1
        %v1527 = vmul.u32 %v1525, 16
        %v1528 = vmul.u32 %v1526, 16
        %vm1529 = vcmp.lt.s32.totalorder %v1517, %v1527
        %vm1530 = vcmp.lt.s32.totalorder %v1518, %v1527
        %vm1531 = vcmp.lt.s32.totalorder %v1517, %v1528
        %vm1532 = vcmp.lt.s32.totalorder %v1518, %v1528
        %vm1533 = vmand %vm1521, %vm1529
        %vm1534 = vmand %vm1522, %vm1530
        %vm1535 = vmand %vm1523, %vm1531
        %vm1536 = vmand %vm1524, %vm1532
        %v1537 = vsel %vm1533, 0.0625, 0.0
        %v1538 = vsel %vm1534, 0.0625, 0.0
        %v1539 = vsel %vm1535, 0.0625, 0.0
        %v1540 = vsel %vm1536, 0.0625, 0.0
        %1541 = vmatprep.subr.mxu0 0.0
        %1542 = vmatpush1.msra.mxu0 %v1481
        %1543 = vmatprep.subr.mxu0 0.0
        %1544 = vmatpush1.msra.mxu0 %v1482
        %1545 = vmatprep.subr.mxu0 0.0
        %1546 = vmatpush1.msra.mxu0 %v1483
        %1547 = vmatprep.subr.mxu0 0.0
        %1548 = vmatpush1.msra.mxu0 %v1484
        %1549 = vmatprep.subr.mxu0 0.0
        %1550 = vmatpush1.msra.mxu0 %v1485
        %1551 = vmatprep.subr.mxu0 0.0
        %1552 = vmatpush1.msra.mxu0 %v1486
        %1553 = vmatprep.subr.mxu0 0.0
        %1554 = vmatpush1.msra.mxu0 %v1487
        %1555 = vmatprep.subr.mxu0 0.0
        %1556 = vmatpush1.msra.mxu0 %v1488
        %1557 = vmatprep.subr.mxu0 0.0
        %1558 = vmatpush1.msra.mxu0 %v1489
        %1559 = vmatprep.subr.mxu0 0.0
        %1560 = vmatpush1.msra.mxu0 %v1490
        %1561 = vmatprep.subr.mxu0 0.0
        %1562 = vmatpush1.msra.mxu0 %v1491
        %1563 = vmatprep.subr.mxu0 0.0
        %1564 = vmatpush1.msra.mxu0 %v1492
        %1565 = vmatprep.subr.mxu0 0.0
        %1566 = vmatpush1.msra.mxu0 %v1493
        %1567 = vmatprep.subr.mxu0 0.0
        %1568 = vmatpush1.msra.mxu0 %v1494
        %1569 = vmatprep.subr.mxu0 0.0
        %1570 = vmatpush1.msra.mxu0 %v1495
        %1571 = vmatprep.subr.mxu0 0.0
        %1572 = vmatpush1.msra.mxu0 %v1496
        %1573 = vmatprep.subr.mxu0 0.0
        %1574 = vmatpush1.msra.mxu0 %v1497
        %1575 = vmatprep.subr.mxu0 0.0
        %1576 = vmatpush1.msra.mxu0 %v1498
        %1577 = vmatprep.subr.mxu0 0.0
        %1578 = vmatpush1.msra.mxu0 %v1499
        %1579 = vmatprep.subr.mxu0 0.0
        %1580 = vmatpush1.msra.mxu0 %v1500
        %1581 = vmatprep.subr.mxu0 0.0
        %1582 = vmatpush1.msra.mxu0 %v1501
        %1583 = vmatprep.subr.mxu0 0.0
        %1584 = vmatpush1.msra.mxu0 %v1502
        %1585 = vmatprep.subr.mxu0 0.0
        %1586 = vmatpush1.msra.mxu0 %v1503
        %1587 = vmatprep.subr.mxu0 0.0
        %1588 = vmatpush1.msra.mxu0 %v1504
        %1589 = vmatprep.subr.mxu0 0.0
        %1590 = vmatpush1.msra.mxu0 %v1505
        %1591 = vmatprep.subr.mxu0 0.0
        %1592 = vmatpush1.msra.mxu0 %v1506
        %1593 = vmatprep.subr.mxu0 0.0
        %1594 = vmatpush1.msra.mxu0 %v1507
        %1595 = vmatprep.subr.mxu0 0.0
        %1596 = vmatpush1.msra.mxu0 %v1508
        %1597 = vmatprep.subr.mxu0 0.0
        %1598 = vmatpush1.msra.mxu0 %v1509
        %1599 = vmatprep.subr.mxu0 0.0
        %1600 = vmatpush1.msra.mxu0 %v1510
        %1601 = vmatprep.subr.mxu0 0.0
        %1602 = vmatpush1.msra.mxu0 %v1511
        %1603 = vmatprep.subr.mxu0 0.0
        %1604 = vmatpush1.msra.mxu0 %v1512
        %1605 = vmatprep.mubr.f32.mxu0 %v1538
        %1606 = vmatmul.mubr.f32.gmra.mrb[0].mxu0 %v1537
        %v1607 = vpop.f32.mrb[0].mxu0
        %v1608 = vadd.f32 0.0, %v1607
        %v1609 = vpop.f32.mrb[0].mxu0
        %1610 = vmatprep.mubr.f32.mxu0 %v1540
        %1611 = vmatmul.mubr.f32.gmra.mrb[0].mxu0 %v1539
        %v1612 = vpop.f32.mrb[0].mxu0
        %v1613 = vadd.f32 0.0, %v1612
        %v1614 = vpop.f32.mrb[0].mxu0
        %1615 = vdwg.mxu0
        %v1616 = vld [vmem:[#allocation10] sm:$0xff]
        %v1617 = vld [vmem:[#allocation10 + $0x8] sm:$0xff]
        %v1618 = vld [vmem:[#allocation10 + $0x10] sm:$0xff]
        %v1619 = vld [vmem:[#allocation10 + $0x18] sm:$0xff]
        %v1620 = vld [vmem:[#allocation10 + $0x20] sm:$0xff]
        %v1621 = vld [vmem:[#allocation10 + $0x28] sm:$0xff]
        %v1622 = vld [vmem:[#allocation10 + $0x30] sm:$0xff]
        %v1623 = vld [vmem:[#allocation10 + $0x38] sm:$0xff]
        %v1624 = vld [vmem:[#allocation10 + $0x40] sm:$0xff]
        %v1625 = vld [vmem:[#allocation10 + $0x48] sm:$0xff]
        %v1626 = vld [vmem:[#allocation10 + $0x50] sm:$0xff]
        %v1627 = vld [vmem:[#allocation10 + $0x58] sm:$0xff]
        %v1628 = vld [vmem:[#allocation10 + $0x60] sm:$0xff]
        %v1629 = vld [vmem:[#allocation10 + $0x68] sm:$0xff]
        %v1630 = vld [vmem:[#allocation10 + $0x70] sm:$0xff]
        %v1631 = vld [vmem:[#allocation10 + $0x78] sm:$0xff]
        %v1632 = vld [vmem:[%s7] sm:$0x1]
        %v1634 = vlaneseq
        %v1635 = vshrl.u32 %v1634, 7
        %v1636 = vsub.s32 0, %v1635
        %v1637 = vrot.slane %v1632, %v1636
        %1639 = vmatprep.subr.mxu0 0.0
        %1640 = vmatpush1.msra.mxu0 %v1616
        %1641 = vmatprep.subr.mxu0 0.0
        %1642 = vmatpush1.msra.mxu0 %v1617
        %1643 = vmatprep.subr.mxu0 0.0
        %1644 = vmatpush1.msra.mxu0 %v1618
        %1645 = vmatprep.subr.mxu0 0.0
        %1646 = vmatpush1.msra.mxu0 %v1619
        %1647 = vmatprep.subr.mxu0 0.0
        %1648 = vmatpush1.msra.mxu0 %v1620
        %1649 = vmatprep.subr.mxu0 0.0
        %1650 = vmatpush1.msra.mxu0 %v1621
        %1651 = vmatprep.subr.mxu0 0.0
        %1652 = vmatpush1.msra.mxu0 %v1622
        %1653 = vmatprep.subr.mxu0 0.0
        %1654 = vmatpush1.msra.mxu0 %v1623
        %1655 = vmatprep.subr.mxu0 0.0
        %1656 = vmatpush1.msra.mxu0 %v1624
        %1657 = vmatprep.subr.mxu0 0.0
        %1658 = vmatpush1.msra.mxu0 %v1625
        %1659 = vmatprep.subr.mxu0 0.0
        %1660 = vmatpush1.msra.mxu0 %v1626
        %1661 = vmatprep.subr.mxu0 0.0
        %1662 = vmatpush1.msra.mxu0 %v1627
        %1663 = vmatprep.subr.mxu0 0.0
        %1664 = vmatpush1.msra.mxu0 %v1628
        %1665 = vmatprep.subr.mxu0 0.0
        %1666 = vmatpush1.msra.mxu0 %v1629
        %1667 = vmatprep.subr.mxu0 0.0
        %1668 = vmatpush1.msra.mxu0 %v1630
        %1669 = vmatprep.subr.mxu0 0.0
        %1670 = vmatpush1.msra.mxu0 %v1631
        %1671 = vmatprep.subr.mxu0 0.0
        %1672 = vmatpush1.msra.mxu0 0.0
        %1673 = vmatprep.subr.mxu0 0.0
        %1674 = vmatpush1.msra.mxu0 0.0
        %1675 = vmatprep.subr.mxu0 0.0
        %1676 = vmatpush1.msra.mxu0 0.0
        %1677 = vmatprep.subr.mxu0 0.0
        %1678 = vmatpush1.msra.mxu0 0.0
        %1679 = vmatprep.subr.mxu0 0.0
        %1680 = vmatpush1.msra.mxu0 0.0
        %1681 = vmatprep.subr.mxu0 0.0
        %1682 = vmatpush1.msra.mxu0 0.0
        %1683 = vmatprep.subr.mxu0 0.0
        %1684 = vmatpush1.msra.mxu0 0.0
        %1685 = vmatprep.subr.mxu0 0.0
        %1686 = vmatpush1.msra.mxu0 0.0
        %1687 = vmatprep.subr.mxu0 0.0
        %1688 = vmatpush1.msra.mxu0 0.0
        %1689 = vmatprep.subr.mxu0 0.0
        %1690 = vmatpush1.msra.mxu0 0.0
        %1691 = vmatprep.subr.mxu0 0.0
        %1692 = vmatpush1.msra.mxu0 0.0
        %1693 = vmatprep.subr.mxu0 0.0
        %1694 = vmatpush1.msra.mxu0 0.0
        %1695 = vmatprep.subr.mxu0 0.0
        %1696 = vmatpush1.msra.mxu0 0.0
        %1697 = vmatprep.subr.mxu0 0.0
        %1698 = vmatpush1.msra.mxu0 0.0
        %1699 = vmatprep.subr.mxu0 0.0
        %1700 = vmatpush1.msra.mxu0 0.0
        %1701 = vmatprep.subr.mxu0 0.0
        %1702 = vmatpush1.msra.mxu0 0.0
        %1703 = vmatprep.mubr.f32.mxu0 0.0
        %1704 = vmatmul.mubr.f32.gmra.mrb[0].mxu0 %v1608
        %v1705 = vpop.f32.mrb[0].mxu0
        %v1706 = vadd.f32 %v1637, %v1705
        %v1707 = vpop.f32.mrb[0].mxu0
        %1708 = vmatprep.mubr.f32.mxu0 0.0
        %1709 = vmatmul.mubr.f32.gmra.mrb[0].mxu0 %v1613
        %v1710 = vpop.f32.mrb[0].mxu0
        %v1711 = vadd.f32 %v1637, %v1710
        %v1712 = vpop.f32.mrb[0].mxu0
        %1713 = vdwg.mxu0
        %1714 = vst [vmem:[%s406] sm:$0xff] %v1706
        %1715 = vst [vmem:[%s406 + $0x8] sm:$0xff] %v1711
        %s1716 = sand.u32 %s215, 1
        %s1717 = scalar_lea.sflag [#allocation4], %s1716
        %s1718 = sand.u32 %s215, 1
        %s1719 = smul.addr %s1718, 16
        %s1720 = scalar_lea.vmem [#allocation11], %s1719
        // Predicated region
        $region73: #{tpu_custom_call.1} parent=51 // pred_check
          %p1721 = pneg %p225
        $region74: #{tpu_custom_call.1} parent=51 // pred_check_branch
          %1723 = sbr.rel (%p1721) target = $region76
        $region75: #{tpu_custom_call.1} parent=51 // pred_region
          %s1725 = ssub.s32 256, 256
          %1726 = vsyncadd %s1717, %s1725
          %s1727 = smul.addr %s29, 2
          %s1728 = smul.addr %s1727, 128
          %s1729 = scalar_lea.hbm %s8, %s1728
          %s1730 = sshll.u32 %s1720, 4
          %s1731 = int_to_ptr.vmem [resolvable:$true] %s1730
          %1736 = dma.vmem_to_hbm [thread:$0]  %s1731, 256, %s1729, %s1717, 128, 128, 8
        $region76: #{tpu_custom_call.1} parent=51 // pred_fallthru
          _
      $region52: #{tpu_custom_call.1} parent=5 // pred_fallthru
        _
      %p1737 = scmp.le.s32.totalorder 2, %s24
      // Predicated region
      $region77: #{tpu_custom_call.1} parent=5 // pred_check
        %p1738 = pneg %p1737
      $region78: #{tpu_custom_call.1} parent=5 // pred_check_branch
        %1740 = sbr.rel (%p1738) target = $region80
      $region79: #{tpu_custom_call.1} parent=5 // pred_region
        %s1741 = ssub.s32 %s24, 2
        // Predicated region
        $region81: #{tpu_custom_call.1} parent=79 // pred_check
          %p1742 = pneg %p231
        $region82: #{tpu_custom_call.1} parent=79 // pred_check_branch
          %1744 = sbr.rel (%p1742) target = $region84
        $region83: #{tpu_custom_call.1} parent=79 // pred_region
          %s1745 = sand.u32 %s216, 1
          %s1746 = scalar_lea.sflag [#allocation4], %s1745
          %s1747 = sand.u32 %s216, 1
          %s1748 = smul.addr %s1747, 16
          %s1749 = scalar_lea.vmem [#allocation11], %s1748
          %1750 = dma.done %s1746, 256
        $region84: #{tpu_custom_call.1} parent=79 // pred_fallthru
          _
      $region80: #{tpu_custom_call.1} parent=5 // pred_fallthru
        _
    $region6: #{tpu_custom_call.1} parent=1 // loop_footer
      %s28 = sadd.s32 1, %s24
    $region7: #{tpu_custom_call.1} parent=1 // loop_footer_branch
      %23 = sbr.rel target = $region3
    $region8: #{tpu_custom_call.1} parent=1 // loop_exit
      _
    %1751 = vsyncpa [#allocation3], 1
    %s1752 = scalar_lea.sflag [#allocation3], 1
    %1753 = vsyncpa %s1752, 1
    %1754 = vsyncpa [#allocation6], 1
    %s1755 = scalar_lea.sflag [#allocation6], 1
    %1756 = vsyncpa %s1755, 1
    %1757 = vsyncpa [#allocation9], 1
    %1758 = vsyncpa [#allocation4], 1
    %s1759 = scalar_lea.sflag [#allocation4], 1
    %1760 = vsyncpa %s1759, 1

</llo_original>
